<compile_context>
chip_gen: v5e
topology: v5e:2x2
jax: 0.10.0
libtpu: 0.0.40
codegen_flags: <defaults>
</compile_context>

<pallas_src>
import math
import functools

import jax
import jax.numpy as jnp
from jax.experimental import pallas as pl
from jax.experimental.pallas import tpu as pltpu


# ---------------------------------------------------------------------------
# Kernel: one grid step = (one batch tile, one encoder layer).
# Layer 0 also performs the embedding combine; the last layer stores output.
# ---------------------------------------------------------------------------
def _layer_norm(x, gamma, beta, eps=1e-5):
    mu = jnp.mean(x, axis=-1, keepdims=True)
    xc = x - mu
    var = jnp.mean(xc * xc, axis=-1, keepdims=True)
    return xc * jax.lax.rsqrt(var + eps) * gamma + beta


def encoder_kernel(
    tok_ref,    # (Bt, S, D)   f32   token embeddings for this batch tile
    pos_ref,    # (S, D)       f32   positional encoding
    bias_ref,   # (Bt, 1, S)   f32   additive key-padding bias (0 or -1e10)
    wqkv_ref,   # (1, D, 3D)   bf16  [Wq*1/sqrt(dh) | Wk | Wv]
    wo_ref,     # (1, D, D)    bf16
    w1_ref,     # (1, D, F)    bf16
    w2_ref,     # (1, F, D)    bf16
    bqkv_ref,   # (1, 1, 3D)   f32
    pvec_ref,   # (1, 6, D)    f32   rows: bo, ln1_g, ln1_b, b2, ln2_g, ln2_b
    b1_ref,     # (1, 1, F)    f32
    o_ref,      # (Bt*S, D)    f32   output slab for this batch tile
    x_scr,      # (Bt*S, D)    f32   activation scratch (persists across L axis)
    *, num_layers, num_heads, head_dim, batch_tile, emb_scale,
):
    l = pl.program_id(1)
    Bt = batch_tile
    H = num_heads
    dh = head_dim
    S, D = pos_ref.shape

    # ---- first layer of each batch tile: embedding combine ---------------
    # tok * sqrt(D) + pos   (dropout = identity)
    @pl.when(l == 0)
    def _():
        x0 = tok_ref[...] * emb_scale + pos_ref[...][None, :, :]   # (Bt, S, D)
        x_scr[...] = x0.reshape(Bt * S, D)

    x = x_scr[...]                                   # (Bt*S, D) f32
    bias = bias_ref[...]                             # (Bt, 1, S)

    wqkv = wqkv_ref[0]                               # (D, 3D) bf16
    wo = wo_ref[0]                                   # (D, D)  bf16
    w1 = w1_ref[0]                                   # (D, F)  bf16
    w2 = w2_ref[0]                                   # (F, D)  bf16
    bqkv = bqkv_ref[0]                               # (1, 3D) f32
    pv = pvec_ref[0]                                 # (6, D)  f32
    b1 = b1_ref[0]                                   # (1, F)  f32

    # ---------------- multi-head self-attention ---------------------------
    xb = x.astype(jnp.bfloat16)

    # One lane-dense matmul for Q, K, V across all heads; 1/sqrt(dh) is
    # already folded into the Q columns/bias (wrapper).
    qkv = jnp.dot(xb, wqkv, preferred_element_type=jnp.float32) + bqkv  # (Bt*S, 3D)

    q3 = qkv[:, 0:D].reshape(Bt, S, D)
    k3 = qkv[:, D:2 * D].reshape(Bt, S, D)
    v3 = qkv[:, 2 * D:3 * D].reshape(Bt, S, D)

    def stack_heads(m3):
        # (Bt, S, H*dh) -> (H*Bt, S, dh); head h occupies rows [h*Bt:(h+1)*Bt].
        # Static lane slices + leading-axis concat only (no 4-D transposes).
        return jnp.concatenate(
            [m3[:, :, h * dh:(h + 1) * dh] for h in range(H)], axis=0)

    q = stack_heads(q3).astype(jnp.bfloat16)          # (H*Bt, S, dh)
    k = stack_heads(k3).astype(jnp.bfloat16)
    v = stack_heads(v3).astype(jnp.bfloat16)

    energy = jnp.einsum("nqd,nkd->nqk", q, k,
                        preferred_element_type=jnp.float32)     # (H*Bt, S, S)
    bias_hb = jnp.concatenate([bias] * H, axis=0)               # (H*Bt, 1, S)
    energy = energy + bias_hb

    # exact f32 softmax (max subtraction for stability)
    m_ = jnp.max(energy, axis=-1, keepdims=True)
    p_ = jnp.exp(energy - m_)
    attn = p_ / jnp.sum(p_, axis=-1, keepdims=True)

    ctx = jnp.einsum("nqk,nkd->nqd", attn.astype(jnp.bfloat16), v,
                     preferred_element_type=jnp.float32)        # (H*Bt, S, dh)

    # merge heads back to (Bt*S, D), then lane-dense (D, D) output projection
    ctx2d = jnp.concatenate(
        [ctx[h * Bt:(h + 1) * Bt] for h in range(H)], axis=-1   # (Bt, S, D)
    ).reshape(Bt * S, D)
    attn_out = jnp.dot(ctx2d.astype(jnp.bfloat16), wo,
                       preferred_element_type=jnp.float32) + pv[0]

    # residual + layernorm 1 (dropout = identity)
    y = _layer_norm(x + attn_out, pv[1], pv[2])

    # ---------------- position-wise feed-forward --------------------------
    h1 = jnp.maximum(
        jnp.dot(y.astype(jnp.bfloat16), w1,
                preferred_element_type=jnp.float32) + b1, 0.0)
    ff = jnp.dot(h1.astype(jnp.bfloat16), w2,
                 preferred_element_type=jnp.float32) + pv[3]

    # residual + layernorm 2
    x_new = _layer_norm(y + ff, pv[4], pv[5])
    x_scr[...] = x_new

    # store only once per batch tile (after the last layer).
    # TODO(synk): at toy D=32 the store is lane-padded; with real D (multiple
    # of 128) this (Bt*S, D) slab is fully lane-dense.
    @pl.when(l == num_layers - 1)
    def _():
        o_ref[...] = x_new.astype(o_ref.dtype)


# ---------------------------------------------------------------------------
# Wrapper: pack parameters (lane-dense layouts, bf16 MXU operands) and launch.
# ---------------------------------------------------------------------------
def pack_layer_params(layers, num_heads):
    D = layers[0]["wq"].shape[0]
    F = layers[0]["w1"].shape[1]
    dh = D // num_heads
    inv_sqrt_dh = 1.0 / math.sqrt(dh)

    wqkv, wo, w1, w2, bqkv, pvec, b1 = [], [], [], [], [], [], []
    for p in layers:
        # fold the attention scale 1/sqrt(dh) into the Q columns / bias
        wqkv.append(jnp.concatenate(
            [p["wq"] * inv_sqrt_dh, p["wk"], p["wv"]], axis=1))          # (D, 3D)
        bqkv.append(jnp.concatenate(
            [p["bq"].reshape(D) * inv_sqrt_dh,
             p["bk"].reshape(D), p["bv"].reshape(D)], axis=0).reshape(1, 3 * D))
        wo.append(p["wo"])                                               # (D, D)
        w1.append(p["w1"])                                               # (D, F)
        w2.append(p["w2"])                                               # (F, D)
        pvec.append(jnp.stack([p["bo"].reshape(D),
                               p["ln1_g"].reshape(D), p["ln1_b"].reshape(D),
                               p["b2"].reshape(D),
                               p["ln2_g"].reshape(D), p["ln2_b"].reshape(D)],
                              axis=0))                                   # (6, D)
        b1.append(p["b1"].reshape(1, F))

    return dict(
        wqkv=jnp.stack(wqkv).astype(jnp.bfloat16),    # (L, D, 3D)
        wo=jnp.stack(wo).astype(jnp.bfloat16),        # (L, D, D)
        w1=jnp.stack(w1).astype(jnp.bfloat16),        # (L, D, F)
        w2=jnp.stack(w2).astype(jnp.bfloat16),        # (L, F, D)
        bqkv=jnp.stack(bqkv).astype(jnp.float32),     # (L, 1, 3D)
        pvec=jnp.stack(pvec).astype(jnp.float32),     # (L, 6, D)
        b1=jnp.stack(b1).astype(jnp.float32),         # (L, 1, F)
    )


def _choose_batch_tile(B, S, rows_target=256):
    """Fold batch into the MXU row dim, but keep >=2 parallel grid steps
    when possible so both TensorCores get work on dual-TC chips (v7x)."""
    bt = max(1, min(B, rows_target // max(S, 1)))
    while B % bt:
        bt -= 1
    if B // bt < 2 and bt > 1:
        bt = max(1, bt // 2)
        while B % bt:
            bt -= 1
    return bt


@functools.partial(jax.jit, static_argnames=("num_layers", "num_heads",
                                             "embed_dim", "batch_tile"))
def encoder_forward(src, src_mask, tok_table, pos_table, packed,
                    num_layers, num_heads, embed_dim, batch_tile):
    B, S = src.shape
    D = embed_dim
    F = packed["w1"].shape[-1]
    L = num_layers
    Bt = batch_tile
    dh = D // num_heads

    # TODO(synk): embedding gather kept in the wrapper; could be fused via
    # PrefetchScalarGridSpec + pl.Element row gather at production sizes.
    tok_emb = tok_table[src]                                   # (B, S, D)
    pos_emb = pos_table[:S]                                    # (S, D)
    # additive key-padding bias: 0 where valid, -1e10 where padded
    mask_bias = jnp.where(src_mask == 0.0,
                          jnp.float32(-1e10), jnp.float32(0.0))  # (B, 1, S)

    kernel = functools.partial(encoder_kernel,
                               num_layers=L, num_heads=num_heads,
                               head_dim=dh, batch_tile=Bt,
                               emb_scale=math.sqrt(D))

    in_specs = [
        pl.BlockSpec((Bt, S, D), lambda b, l: (b, 0, 0)),       # tok_emb
        pl.BlockSpec((S, D), lambda b, l: (0, 0)),              # pos_emb
        pl.BlockSpec((Bt, 1, S), lambda b, l: (b, 0, 0)),       # mask bias
        pl.BlockSpec((1, D, 3 * D), lambda b, l: (l, 0, 0)),    # wqkv
        pl.BlockSpec((1, D, D), lambda b, l: (l, 0, 0)),        # wo
        pl.BlockSpec((1, D, F), lambda b, l: (l, 0, 0)),        # w1
        pl.BlockSpec((1, F, D), lambda b, l: (l, 0, 0)),        # w2
        pl.BlockSpec((1, 1, 3 * D), lambda b, l: (l, 0, 0)),    # bqkv
        pl.BlockSpec((1, 6, D), lambda b, l: (l, 0, 0)),        # pvec
        pl.BlockSpec((1, 1, F), lambda b, l: (l, 0, 0)),        # b1
    ]

    # Explicit VMEM budget: ~2 layers of weights (double-buffered layer axis)
    # + activations + headroom, clamped <= 48 MiB (legal on v7x's 64 MiB).
    per_layer_w = 2 * (D * 3 * D + D * D + D * F + F * D)          # bf16 bytes
    per_layer_b = 4 * (3 * D + 6 * D + F)
    acts = 4 * (Bt * S * (4 * D + 3 * D + F) + num_heads * Bt * S * S * 3
                + Bt * S * D + S * D + Bt * S)
    vmem_bytes = int(min(max(4 * (2 * (per_layer_w + per_layer_b) + acts),
                             32 * 1024 * 1024),
                         48 * 1024 * 1024))

    out = pl.pallas_call(
        kernel,
        out_shape=jax.ShapeDtypeStruct((B * S, D), jnp.float32),
        grid=(B // Bt, L),
        in_specs=in_specs,
        out_specs=pl.BlockSpec((Bt * S, D), lambda b, l: (b, 0)),
        scratch_shapes=[pltpu.VMEM((Bt * S, D), jnp.float32)],
        compiler_params=pltpu.CompilerParams(
            dimension_semantics=("parallel", "arbitrary"),
            vmem_limit_bytes=vmem_bytes),
    )(tok_emb, pos_emb, mask_bias,
      packed["wqkv"], packed["wo"], packed["w1"], packed["w2"],
      packed["bqkv"], packed["pvec"], packed["b1"])

    return out.reshape(B, S, D)


# ---------------------------------------------------------------------------
# Parameter construction + sinusoidal positional encoding (plain JAX glue)
# ---------------------------------------------------------------------------
def get_positional_encoding(max_seq_len, embed_dim):
    position = jnp.arange(max_seq_len, dtype=jnp.float32)[:, None]
    div_term = jnp.exp(
        jnp.arange(0, embed_dim, 2, dtype=jnp.float32)
        * (-math.log(10000.0) / embed_dim))
    pe = jnp.zeros((max_seq_len, embed_dim), jnp.float32)
    pe = pe.at[:, 0::2].set(jnp.sin(position * div_term))
    pe = pe.at[:, 1::2].set(jnp.cos(position * div_term))
    return pe


def init_params(key, input_dim, embed_dim, num_layers, expand_dim):
    keys = iter(jax.random.split(key, 2 + num_layers * 16))
    nrm = lambda shp, s=0.02: jax.random.normal(next(keys), shp, jnp.float32) * s

    tok_table = jax.random.normal(next(keys), (input_dim, embed_dim), jnp.float32)
    layers = []
    for _ in range(num_layers):
        D, F = embed_dim, expand_dim
        layers.append(dict(
            wq=nrm((D, D)), bq=nrm((1, D)),
            wk=nrm((D, D)), bk=nrm((1, D)),
            wv=nrm((D, D)), bv=nrm((1, D)),
            wo=nrm((D, D)), bo=nrm((1, D)),
            ln1_g=jnp.ones((1, D), jnp.float32), ln1_b=jnp.zeros((1, D), jnp.float32),
            w1=nrm((D, F)), b1=nrm((1, F)),
            w2=nrm((F, D)), b2=nrm((1, D)),
            ln2_g=jnp.ones((1, D), jnp.float32), ln2_b=jnp.zeros((1, D), jnp.float32),
        ))
    return tok_table, layers


# ---------------------------------------------------------------------------
if __name__ == "__main__":
    # small shapes consistent with the module
    input_dim = 16      # vocab size
    embed_dim = 32
    num_layers = 2
    num_heads = 4
    expand_dim = 64
    max_length = 30
    B, S = 2, 8

    key = jax.random.PRNGKey(0)
    k_tok, k_par = jax.random.split(key)

    src = jax.random.randint(k_tok, (B, S), 0, input_dim, dtype=jnp.int32)
    # mask: (B, 1, S), 1.0 = valid token, 0.0 = padding (pad last 2 of batch 1)
    src_mask = jnp.ones((B, 1, S), jnp.float32)
    src_mask = src_mask.at[1, 0, 6:].set(0.0)

    tok_table, layers = init_params(k_par, input_dim, embed_dim, num_layers, expand_dim)
    pos_table = get_positional_encoding(max_length, embed_dim)
    packed = pack_layer_params(layers, num_heads)

    Bt = _choose_batch_tile(B, S)

    # TODO(synk): dropout omitted (inference mode -> identity)
    out = encoder_forward(src, src_mask, tok_table, pos_table, packed,
                          num_layers, num_heads, embed_dim, Bt)
    out = jax.block_until_ready(out)
    assert out.shape == (B, S, embed_dim)
    assert bool(jnp.all(jnp.isfinite(out)))
    print("KERNEL_OK")
</pallas_src>

<mosaic_0001>
module attributes {stable_mosaic.version = 11 : i64} {
  func.func @encoder_kernel(%arg0: i32, %arg1: i32, %arg2: memref<1x8x32xf32, #tpu.memory_space<vmem>>, %arg3: memref<8x32xf32, #tpu.memory_space<vmem>>, %arg4: memref<1x1x8xf32, #tpu.memory_space<vmem>>, %arg5: memref<1x32x96xbf16, #tpu.memory_space<vmem>>, %arg6: memref<1x32x32xbf16, #tpu.memory_space<vmem>>, %arg7: memref<1x32x64xbf16, #tpu.memory_space<vmem>>, %arg8: memref<1x64x32xbf16, #tpu.memory_space<vmem>>, %arg9: memref<1x1x96xf32, #tpu.memory_space<vmem>>, %arg10: memref<1x6x32xf32, #tpu.memory_space<vmem>>, %arg11: memref<1x1x64xf32, #tpu.memory_space<vmem>>, %arg12: memref<8x32xf32, #tpu.memory_space<vmem>>, %arg13: memref<8x32xf32, #tpu.memory_space<vmem>>) attributes {dimension_semantics = [#tpu.dimension_semantics<parallel>, #tpu.dimension_semantics<arbitrary>], iteration_bounds = array<i64: 2, 2>, scalar_prefetch = 0 : i64, scratch_operands = 1 : i64, tpu.core_type = #tpu.core_type<tc>, window_params = [{transform_indices = @transform_0, window_bounds = array<i64: 1, 8, 32>}, {pipeline_mode = #tpu.pipeline_mode<synchronous>, transform_indices = @transform_1, window_bounds = array<i64: 8, 32>}, {transform_indices = @transform_2, window_bounds = array<i64: 1, 1, 8>}, {transform_indices = @transform_3, window_bounds = array<i64: 1, 32, 96>}, {transform_indices = @transform_4, window_bounds = array<i64: 1, 32, 32>}, {transform_indices = @transform_5, window_bounds = array<i64: 1, 32, 64>}, {transform_indices = @transform_6, window_bounds = array<i64: 1, 64, 32>}, {transform_indices = @transform_7, window_bounds = array<i64: 1, 1, 96>}, {transform_indices = @transform_8, window_bounds = array<i64: 1, 6, 32>}, {transform_indices = @transform_9, window_bounds = array<i64: 1, 1, 64>}, {transform_indices = @transform_10, window_bounds = array<i64: 8, 32>}]} {
    %c0_i32 = arith.constant 0 : i32
    %0 = arith.cmpi eq, %arg1, %c0_i32 : i32
    %1 = arith.extui %0 : i1 to i32
    %c0_i32_0 = arith.constant 0 : i32
    %2 = arith.cmpi ne, %1, %c0_i32_0 : i32
    scf.if %2 {
      %c0_47 = arith.constant 0 : index
      %c0_48 = arith.constant 0 : index
      %c0_49 = arith.constant 0 : index
      %146 = vector.load %arg2[%c0_47, %c0_48, %c0_49] : memref<1x8x32xf32, #tpu.memory_space<vmem>>, vector<1x8x32xf32>
      %cst_50 = arith.constant 5.65685415 : f32
      %147 = vector.broadcast %cst_50 : f32 to vector<1x8x32xf32>
      %148 = arith.mulf %146, %147 : vector<1x8x32xf32>
      %c0_51 = arith.constant 0 : index
      %c0_52 = arith.constant 0 : index
      %149 = vector.load %arg3[%c0_51, %c0_52] : memref<8x32xf32, #tpu.memory_space<vmem>>, vector<8x32xf32>
      %150 = vector.shape_cast %149 : vector<8x32xf32> to vector<1x8x32xf32>
      %151 = arith.addf %148, %150 : vector<1x8x32xf32>
      %152 = vector.shape_cast %151 : vector<1x8x32xf32> to vector<8x32xf32>
      %c0_53 = arith.constant 0 : index
      %c0_54 = arith.constant 0 : index
      %153 = vector.load %arg13[%c0_53, %c0_54] : memref<8x32xf32, #tpu.memory_space<vmem>>, vector<8x32xf32>
      tpu.vector_store %arg13[%c0_53, %c0_54], %152 {strides = array<i32>} : memref<8x32xf32, #tpu.memory_space<vmem>>, vector<8x32xf32>,
    } else {
    }
    %c0 = arith.constant 0 : index
    %c0_1 = arith.constant 0 : index
    %3 = vector.load %arg13[%c0, %c0_1] : memref<8x32xf32, #tpu.memory_space<vmem>>, vector<8x32xf32>
    %c0_2 = arith.constant 0 : index
    %c0_3 = arith.constant 0 : index
    %c0_4 = arith.constant 0 : index
    %4 = vector.load %arg4[%c0_2, %c0_3, %c0_4] : memref<1x1x8xf32, #tpu.memory_space<vmem>>, vector<1x1x8xf32>
    %c0_5 = arith.constant 0 : index
    %c0_6 = arith.constant 0 : index
    %c0_7 = arith.constant 0 : index
    %5 = vector.load %arg5[%c0_5, %c0_6, %c0_7] : memref<1x32x96xbf16, #tpu.memory_space<vmem>>, vector<1x32x96xbf16>
    %6 = vector.shape_cast %5 : vector<1x32x96xbf16> to vector<32x96xbf16>
    %c0_8 = arith.constant 0 : index
    %c0_9 = arith.constant 0 : index
    %c0_10 = arith.constant 0 : index
    %7 = vector.load %arg6[%c0_8, %c0_9, %c0_10] : memref<1x32x32xbf16, #tpu.memory_space<vmem>>, vector<1x32x32xbf16>
    %8 = vector.shape_cast %7 : vector<1x32x32xbf16> to vector<32x32xbf16>
    %c0_11 = arith.constant 0 : index
    %c0_12 = arith.constant 0 : index
    %c0_13 = arith.constant 0 : index
    %9 = vector.load %arg7[%c0_11, %c0_12, %c0_13] : memref<1x32x64xbf16, #tpu.memory_space<vmem>>, vector<1x32x64xbf16>
    %10 = vector.shape_cast %9 : vector<1x32x64xbf16> to vector<32x64xbf16>
    %c0_14 = arith.constant 0 : index
    %c0_15 = arith.constant 0 : index
    %c0_16 = arith.constant 0 : index
    %11 = vector.load %arg8[%c0_14, %c0_15, %c0_16] : memref<1x64x32xbf16, #tpu.memory_space<vmem>>, vector<1x64x32xbf16>
    %12 = vector.shape_cast %11 : vector<1x64x32xbf16> to vector<64x32xbf16>
    %c0_17 = arith.constant 0 : index
    %c0_18 = arith.constant 0 : index
    %c0_19 = arith.constant 0 : index
    %13 = vector.load %arg9[%c0_17, %c0_18, %c0_19] : memref<1x1x96xf32, #tpu.memory_space<vmem>>, vector<1x1x96xf32>
    %14 = vector.shape_cast %13 : vector<1x1x96xf32> to vector<1x96xf32>
    %c0_20 = arith.constant 0 : index
    %c0_21 = arith.constant 0 : index
    %c0_22 = arith.constant 0 : index
    %15 = vector.load %arg10[%c0_20, %c0_21, %c0_22] : memref<1x6x32xf32, #tpu.memory_space<vmem>>, vector<1x6x32xf32>
    %16 = vector.shape_cast %15 : vector<1x6x32xf32> to vector<6x32xf32>
    %c0_23 = arith.constant 0 : index
    %c0_24 = arith.constant 0 : index
    %c0_25 = arith.constant 0 : index
    %17 = vector.load %arg11[%c0_23, %c0_24, %c0_25] : memref<1x1x64xf32, #tpu.memory_space<vmem>>, vector<1x1x64xf32>
    %18 = vector.shape_cast %17 : vector<1x1x64xf32> to vector<1x64xf32>
    %19 = arith.truncf %3 : vector<8x32xf32> to vector<8x32xbf16>
    %cst = arith.constant dense<0.000000e+00> : vector<8x96xf32>
    %20 = tpu.matmul %19, %6, %cst {dimension_numbers = #tpu.dot_dimension_numbers<[1], [0], [0], [1], [0, 0, 1, 1], [], []>} : vector<8x32xbf16>, vector<32x96xbf16>, vector<8x96xf32> -> vector<8x96xf32>
    %21 = vector.broadcast %14 : vector<1x96xf32> to vector<8x96xf32>
    %22 = arith.addf %20, %21 : vector<8x96xf32>
    %23 = vector.extract_strided_slice %22 {offsets = [0, 0], sizes = [8, 32], strides = [1, 1]} : vector<8x96xf32> to vector<8x32xf32>
    %24 = vector.shape_cast %23 : vector<8x32xf32> to vector<1x8x32xf32>
    %25 = vector.extract_strided_slice %22 {offsets = [0, 32], sizes = [8, 32], strides = [1, 1]} : vector<8x96xf32> to vector<8x32xf32>
    %26 = vector.shape_cast %25 : vector<8x32xf32> to vector<1x8x32xf32>
    %27 = vector.extract_strided_slice %22 {offsets = [0, 64], sizes = [8, 32], strides = [1, 1]} : vector<8x96xf32> to vector<8x32xf32>
    %28 = vector.shape_cast %27 : vector<8x32xf32> to vector<1x8x32xf32>
    %29 = vector.extract_strided_slice %24 {offsets = [0, 0, 0], sizes = [1, 8, 8], strides = [1, 1, 1]} : vector<1x8x32xf32> to vector<1x8x8xf32>
    %30 = vector.extract_strided_slice %24 {offsets = [0, 0, 8], sizes = [1, 8, 8], strides = [1, 1, 1]} : vector<1x8x32xf32> to vector<1x8x8xf32>
    %31 = vector.extract_strided_slice %24 {offsets = [0, 0, 16], sizes = [1, 8, 8], strides = [1, 1, 1]} : vector<1x8x32xf32> to vector<1x8x8xf32>
    %32 = vector.extract_strided_slice %24 {offsets = [0, 0, 24], sizes = [1, 8, 8], strides = [1, 1, 1]} : vector<1x8x32xf32> to vector<1x8x8xf32>
    %33 = tpu.concatenate %29, %30, %31, %32 in 0 : vector<1x8x8xf32>, vector<1x8x8xf32>, vector<1x8x8xf32>, vector<1x8x8xf32> -> vector<4x8x8xf32>
    %34 = arith.truncf %33 : vector<4x8x8xf32> to vector<4x8x8xbf16>
    %35 = vector.extract_strided_slice %26 {offsets = [0, 0, 0], sizes = [1, 8, 8], strides = [1, 1, 1]} : vector<1x8x32xf32> to vector<1x8x8xf32>
    %36 = vector.extract_strided_slice %26 {offsets = [0, 0, 8], sizes = [1, 8, 8], strides = [1, 1, 1]} : vector<1x8x32xf32> to vector<1x8x8xf32>
    %37 = vector.extract_strided_slice %26 {offsets = [0, 0, 16], sizes = [1, 8, 8], strides = [1, 1, 1]} : vector<1x8x32xf32> to vector<1x8x8xf32>
    %38 = vector.extract_strided_slice %26 {offsets = [0, 0, 24], sizes = [1, 8, 8], strides = [1, 1, 1]} : vector<1x8x32xf32> to vector<1x8x8xf32>
    %39 = tpu.concatenate %35, %36, %37, %38 in 0 : vector<1x8x8xf32>, vector<1x8x8xf32>, vector<1x8x8xf32>, vector<1x8x8xf32> -> vector<4x8x8xf32>
    %40 = arith.truncf %39 : vector<4x8x8xf32> to vector<4x8x8xbf16>
    %41 = vector.extract_strided_slice %28 {offsets = [0, 0, 0], sizes = [1, 8, 8], strides = [1, 1, 1]} : vector<1x8x32xf32> to vector<1x8x8xf32>
    %42 = vector.extract_strided_slice %28 {offsets = [0, 0, 8], sizes = [1, 8, 8], strides = [1, 1, 1]} : vector<1x8x32xf32> to vector<1x8x8xf32>
    %43 = vector.extract_strided_slice %28 {offsets = [0, 0, 16], sizes = [1, 8, 8], strides = [1, 1, 1]} : vector<1x8x32xf32> to vector<1x8x8xf32>
    %44 = vector.extract_strided_slice %28 {offsets = [0, 0, 24], sizes = [1, 8, 8], strides = [1, 1, 1]} : vector<1x8x32xf32> to vector<1x8x8xf32>
    %45 = tpu.concatenate %41, %42, %43, %44 in 0 : vector<1x8x8xf32>, vector<1x8x8xf32>, vector<1x8x8xf32>, vector<1x8x8xf32> -> vector<4x8x8xf32>
    %46 = arith.truncf %45 : vector<4x8x8xf32> to vector<4x8x8xbf16>
    "tpu.trace_start"() <{level = 10 : i32, message = "nqd,nkd->nqk"}> : () -> ()
    %cst_26 = arith.constant dense<0.000000e+00> : vector<4x8x8xf32>
    %47 = tpu.matmul %34, %40, %cst_26 {dimension_numbers = #tpu.dot_dimension_numbers<[2], [2], [1], [1], [0, 0, 0, 1, 1, 1], [0], [0]>} : vector<4x8x8xbf16>, vector<4x8x8xbf16>, vector<4x8x8xf32> -> vector<4x8x8xf32>
    "tpu.trace_stop"() : () -> ()
    %48 = tpu.concatenate %4, %4, %4, %4 in 0 : vector<1x1x8xf32>, vector<1x1x8xf32>, vector<1x1x8xf32>, vector<1x1x8xf32> -> vector<4x1x8xf32>
    %49 = vector.broadcast %48 : vector<4x1x8xf32> to vector<4x8x8xf32>
    %50 = arith.addf %47, %49 : vector<4x8x8xf32>
    %cst_27 = arith.constant dense<0xFF800000> : vector<4x8xf32>
    %51 = vector.multi_reduction <maximumf>, %50, %cst_27 [2] : vector<4x8x8xf32> to vector<4x8xf32>
    %52 = vector.shape_cast %51 : vector<4x8xf32> to vector<4x8x1xf32>
    %53 = vector.broadcast %52 : vector<4x8x1xf32> to vector<4x8x8xf32>
    %54 = arith.subf %50, %53 : vector<4x8x8xf32>
    %55 = math.exp %54 : vector<4x8x8xf32>
    %cst_28 = arith.constant dense<0.000000e+00> : vector<4x8xf32>
    %56 = vector.multi_reduction <add>, %55, %cst_28 [2] : vector<4x8x8xf32> to vector<4x8xf32>
    %57 = vector.shape_cast %56 : vector<4x8xf32> to vector<4x8x1xf32>
    %58 = vector.broadcast %57 : vector<4x8x1xf32> to vector<4x8x8xf32>
    %59 = arith.divf %55, %58 : vector<4x8x8xf32>
    %60 = arith.truncf %59 : vector<4x8x8xf32> to vector<4x8x8xbf16>
    "tpu.trace_start"() <{level = 10 : i32, message = "nqk,nkd->nqd"}> : () -> ()
    %cst_29 = arith.constant dense<0.000000e+00> : vector<4x8x8xf32>
    %61 = tpu.matmul %60, %46, %cst_29 {dimension_numbers = #tpu.dot_dimension_numbers<[2], [1], [1], [2], [0, 0, 0, 1, 1, 2], [0], [0]>} : vector<4x8x8xbf16>, vector<4x8x8xbf16>, vector<4x8x8xf32> -> vector<4x8x8xf32>
    "tpu.trace_stop"() : () -> ()
    %62 = vector.extract_strided_slice %61 {offsets = [0, 0, 0], sizes = [1, 8, 8], strides = [1, 1, 1]} : vector<4x8x8xf32> to vector<1x8x8xf32>
    %63 = vector.extract_strided_slice %61 {offsets = [1, 0, 0], sizes = [1, 8, 8], strides = [1, 1, 1]} : vector<4x8x8xf32> to vector<1x8x8xf32>
    %64 = vector.extract_strided_slice %61 {offsets = [2, 0, 0], sizes = [1, 8, 8], strides = [1, 1, 1]} : vector<4x8x8xf32> to vector<1x8x8xf32>
    %65 = vector.extract_strided_slice %61 {offsets = [3, 0, 0], sizes = [1, 8, 8], strides = [1, 1, 1]} : vector<4x8x8xf32> to vector<1x8x8xf32>
    %66 = tpu.concatenate %62, %63, %64, %65 in 2 : vector<1x8x8xf32>, vector<1x8x8xf32>, vector<1x8x8xf32>, vector<1x8x8xf32> -> vector<1x8x32xf32>
    %67 = vector.shape_cast %66 : vector<1x8x32xf32> to vector<8x32xf32>
    %68 = arith.truncf %67 : vector<8x32xf32> to vector<8x32xbf16>
    %cst_30 = arith.constant dense<0.000000e+00> : vector<8x32xf32>
    %69 = tpu.matmul %68, %8, %cst_30 {dimension_numbers = #tpu.dot_dimension_numbers<[1], [0], [0], [1], [0, 0, 1, 1], [], []>} : vector<8x32xbf16>, vector<32x32xbf16>, vector<8x32xf32> -> vector<8x32xf32>
    %70 = vector.extract_strided_slice %16 {offsets = [0, 0], sizes = [1, 32], strides = [1, 1]} : vector<6x32xf32> to vector<1x32xf32>
    %71 = vector.shape_cast %70 : vector<1x32xf32> to vector<32xf32>
    %72 = vector.shape_cast %71 : vector<32xf32> to vector<1x32xf32>
    %73 = vector.broadcast %72 : vector<1x32xf32> to vector<8x32xf32>
    %74 = arith.addf %69, %73 : vector<8x32xf32>
    %75 = arith.addf %3, %74 : vector<8x32xf32>
    %76 = vector.extract_strided_slice %16 {offsets = [1, 0], sizes = [1, 32], strides = [1, 1]} : vector<6x32xf32> to vector<1x32xf32>
    %77 = vector.shape_cast %76 : vector<1x32xf32> to vector<32xf32>
    %78 = vector.extract_strided_slice %16 {offsets = [2, 0], sizes = [1, 32], strides = [1, 1]} : vector<6x32xf32> to vector<1x32xf32>
    %79 = vector.shape_cast %78 : vector<1x32xf32> to vector<32xf32>
    %cst_31 = arith.constant dense<0.000000e+00> : vector<8xf32>
    %80 = vector.multi_reduction <add>, %75, %cst_31 [1] : vector<8x32xf32> to vector<8xf32>
    %81 = vector.shape_cast %80 : vector<8xf32> to vector<8x1xf32>
    %cst_32 = arith.constant 3.200000e+01 : f32
    %82 = vector.broadcast %cst_32 : f32 to vector<8x1xf32>
    %83 = arith.divf %81, %82 : vector<8x1xf32>
    %84 = vector.broadcast %83 : vector<8x1xf32> to vector<8x32xf32>
    %85 = arith.subf %75, %84 : vector<8x32xf32>
    %86 = arith.mulf %85, %85 : vector<8x32xf32>
    %cst_33 = arith.constant dense<0.000000e+00> : vector<8xf32>
    %87 = vector.multi_reduction <add>, %86, %cst_33 [1] : vector<8x32xf32> to vector<8xf32>
    %88 = vector.shape_cast %87 : vector<8xf32> to vector<8x1xf32>
    %cst_34 = arith.constant 3.200000e+01 : f32
    %89 = vector.broadcast %cst_34 : f32 to vector<8x1xf32>
    %90 = arith.divf %88, %89 : vector<8x1xf32>
    %cst_35 = arith.constant 9.99999974E-6 : f32
    %91 = vector.broadcast %cst_35 : f32 to vector<8x1xf32>
    %92 = arith.addf %90, %91 : vector<8x1xf32>
    %93 = math.rsqrt %92 : vector<8x1xf32>
    %94 = vector.broadcast %93 : vector<8x1xf32> to vector<8x32xf32>
    %95 = arith.mulf %85, %94 : vector<8x32xf32>
    %96 = vector.shape_cast %77 : vector<32xf32> to vector<1x32xf32>
    %97 = vector.broadcast %96 : vector<1x32xf32> to vector<8x32xf32>
    %98 = arith.mulf %95, %97 : vector<8x32xf32>
    %99 = vector.shape_cast %79 : vector<32xf32> to vector<1x32xf32>
    %100 = vector.broadcast %99 : vector<1x32xf32> to vector<8x32xf32>
    %101 = arith.addf %98, %100 : vector<8x32xf32>
    %102 = arith.truncf %101 : vector<8x32xf32> to vector<8x32xbf16>
    %cst_36 = arith.constant dense<0.000000e+00> : vector<8x64xf32>
    %103 = tpu.matmul %102, %10, %cst_36 {dimension_numbers = #tpu.dot_dimension_numbers<[1], [0], [0], [1], [0, 0, 1, 1], [], []>} : vector<8x32xbf16>, vector<32x64xbf16>, vector<8x64xf32> -> vector<8x64xf32>
    %104 = vector.broadcast %18 : vector<1x64xf32> to vector<8x64xf32>
    %105 = arith.addf %103, %104 : vector<8x64xf32>
    %cst_37 = arith.constant 0.000000e+00 : f32
    %106 = vector.broadcast %cst_37 : f32 to vector<8x64xf32>
    %107 = arith.maximumf %105, %106 : vector<8x64xf32>
    %108 = arith.truncf %107 : vector<8x64xf32> to vector<8x64xbf16>
    %cst_38 = arith.constant dense<0.000000e+00> : vector<8x32xf32>
    %109 = tpu.matmul %108, %12, %cst_38 {dimension_numbers = #tpu.dot_dimension_numbers<[1], [0], [0], [1], [0, 0, 1, 1], [], []>} : vector<8x64xbf16>, vector<64x32xbf16>, vector<8x32xf32> -> vector<8x32xf32>
    %110 = vector.extract_strided_slice %16 {offsets = [3, 0], sizes = [1, 32], strides = [1, 1]} : vector<6x32xf32> to vector<1x32xf32>
    %111 = vector.shape_cast %110 : vector<1x32xf32> to vector<32xf32>
    %112 = vector.shape_cast %111 : vector<32xf32> to vector<1x32xf32>
    %113 = vector.broadcast %112 : vector<1x32xf32> to vector<8x32xf32>
    %114 = arith.addf %109, %113 : vector<8x32xf32>
    %115 = arith.addf %101, %114 : vector<8x32xf32>
    %116 = vector.extract_strided_slice %16 {offsets = [4, 0], sizes = [1, 32], strides = [1, 1]} : vector<6x32xf32> to vector<1x32xf32>
    %117 = vector.shape_cast %116 : vector<1x32xf32> to vector<32xf32>
    %118 = vector.extract_strided_slice %16 {offsets = [5, 0], sizes = [1, 32], strides = [1, 1]} : vector<6x32xf32> to vector<1x32xf32>
    %119 = vector.shape_cast %118 : vector<1x32xf32> to vector<32xf32>
    %cst_39 = arith.constant dense<0.000000e+00> : vector<8xf32>
    %120 = vector.multi_reduction <add>, %115, %cst_39 [1] : vector<8x32xf32> to vector<8xf32>
    %121 = vector.shape_cast %120 : vector<8xf32> to vector<8x1xf32>
    %cst_40 = arith.constant 3.200000e+01 : f32
    %122 = vector.broadcast %cst_40 : f32 to vector<8x1xf32>
    %123 = arith.divf %121, %122 : vector<8x1xf32>
    %124 = vector.broadcast %123 : vector<8x1xf32> to vector<8x32xf32>
    %125 = arith.subf %115, %124 : vector<8x32xf32>
    %126 = arith.mulf %125, %125 : vector<8x32xf32>
    %cst_41 = arith.constant dense<0.000000e+00> : vector<8xf32>
    %127 = vector.multi_reduction <add>, %126, %cst_41 [1] : vector<8x32xf32> to vector<8xf32>
    %128 = vector.shape_cast %127 : vector<8xf32> to vector<8x1xf32>
    %cst_42 = arith.constant 3.200000e+01 : f32
    %129 = vector.broadcast %cst_42 : f32 to vector<8x1xf32>
    %130 = arith.divf %128, %129 : vector<8x1xf32>
    %cst_43 = arith.constant 9.99999974E-6 : f32
    %131 = vector.broadcast %cst_43 : f32 to vector<8x1xf32>
    %132 = arith.addf %130, %131 : vector<8x1xf32>
    %133 = math.rsqrt %132 : vector<8x1xf32>
    %134 = vector.broadcast %133 : vector<8x1xf32> to vector<8x32xf32>
    %135 = arith.mulf %125, %134 : vector<8x32xf32>
    %136 = vector.shape_cast %117 : vector<32xf32> to vector<1x32xf32>
    %137 = vector.broadcast %136 : vector<1x32xf32> to vector<8x32xf32>
    %138 = arith.mulf %135, %137 : vector<8x32xf32>
    %139 = vector.shape_cast %119 : vector<32xf32> to vector<1x32xf32>
    %140 = vector.broadcast %139 : vector<1x32xf32> to vector<8x32xf32>
    %141 = arith.addf %138, %140 : vector<8x32xf32>
    %c0_44 = arith.constant 0 : index
    %c0_45 = arith.constant 0 : index
    %142 = vector.load %arg13[%c0_44, %c0_45] : memref<8x32xf32, #tpu.memory_space<vmem>>, vector<8x32xf32>
    tpu.vector_store %arg13[%c0_44, %c0_45], %141 {strides = array<i32>} : memref<8x32xf32, #tpu.memory_space<vmem>>, vector<8x32xf32>,
    %c1_i32 = arith.constant 1 : i32
    %143 = arith.cmpi eq, %arg1, %c1_i32 : i32
    %144 = arith.extui %143 : i1 to i32
    %c0_i32_46 = arith.constant 0 : i32
    %145 = arith.cmpi ne, %144, %c0_i32_46 : i32
    scf.if %145 {
      %c0_47 = arith.constant 0 : index
      %c0_48 = arith.constant 0 : index
      %146 = vector.load %arg12[%c0_47, %c0_48] : memref<8x32xf32, #tpu.memory_space<vmem>>, vector<8x32xf32>
      tpu.vector_store %arg12[%c0_47, %c0_48], %141 {strides = array<i32>} : memref<8x32xf32, #tpu.memory_space<vmem>>, vector<8x32xf32>,
    } else {
    }
    return
  }
  func.func @transform_0(%arg0: i32, %arg1: i32) -> (i32, i32, i32) {
    %c0_i32 = arith.constant 0 : i32
    %c0_i32_0 = arith.constant 0 : i32
    %c0_i32_1 = arith.constant 0 : i32
    return %arg0, %c0_i32, %c0_i32_0 : i32, i32, i32
  }
  func.func @transform_1(%arg0: i32, %arg1: i32) -> (i32, i32) {
    %c0_i32 = arith.constant 0 : i32
    %c0_i32_0 = arith.constant 0 : i32
    %c0_i32_1 = arith.constant 0 : i32
    return %c0_i32, %c0_i32_0 : i32, i32
  }
  func.func @transform_2(%arg0: i32, %arg1: i32) -> (i32, i32, i32) {
    %c0_i32 = arith.constant 0 : i32
    %c0_i32_0 = arith.constant 0 : i32
    %c0_i32_1 = arith.constant 0 : i32
    return %arg0, %c0_i32, %c0_i32_0 : i32, i32, i32
  }
  func.func @transform_3(%arg0: i32, %arg1: i32) -> (i32, i32, i32) {
    %c0_i32 = arith.constant 0 : i32
    %c0_i32_0 = arith.constant 0 : i32
    %c0_i32_1 = arith.constant 0 : i32
    return %arg1, %c0_i32, %c0_i32_0 : i32, i32, i32
  }
  func.func @transform_4(%arg0: i32, %arg1: i32) -> (i32, i32, i32) {
    %c0_i32 = arith.constant 0 : i32
    %c0_i32_0 = arith.constant 0 : i32
    %c0_i32_1 = arith.constant 0 : i32
    return %arg1, %c0_i32, %c0_i32_0 : i32, i32, i32
  }
  func.func @transform_5(%arg0: i32, %arg1: i32) -> (i32, i32, i32) {
    %c0_i32 = arith.constant 0 : i32
    %c0_i32_0 = arith.constant 0 : i32
    %c0_i32_1 = arith.constant 0 : i32
    return %arg1, %c0_i32, %c0_i32_0 : i32, i32, i32
  }
  func.func @transform_6(%arg0: i32, %arg1: i32) -> (i32, i32, i32) {
    %c0_i32 = arith.constant 0 : i32
    %c0_i32_0 = arith.constant 0 : i32
    %c0_i32_1 = arith.constant 0 : i32
    return %arg1, %c0_i32, %c0_i32_0 : i32, i32, i32
  }
  func.func @transform_7(%arg0: i32, %arg1: i32) -> (i32, i32, i32) {
    %c0_i32 = arith.constant 0 : i32
    %c0_i32_0 = arith.constant 0 : i32
    %c0_i32_1 = arith.constant 0 : i32
    return %arg1, %c0_i32, %c0_i32_0 : i32, i32, i32
  }
  func.func @transform_8(%arg0: i32, %arg1: i32) -> (i32, i32, i32) {
    %c0_i32 = arith.constant 0 : i32
    %c0_i32_0 = arith.constant 0 : i32
    %c0_i32_1 = arith.constant 0 : i32
    return %arg1, %c0_i32, %c0_i32_0 : i32, i32, i32
  }
  func.func @transform_9(%arg0: i32, %arg1: i32) -> (i32, i32, i32) {
    %c0_i32 = arith.constant 0 : i32
    %c0_i32_0 = arith.constant 0 : i32
    %c0_i32_1 = arith.constant 0 : i32
    return %arg1, %c0_i32, %c0_i32_0 : i32, i32, i32
  }
  func.func @transform_10(%arg0: i32, %arg1: i32) -> (i32, i32) {
    %c0_i32 = arith.constant 0 : i32
    %c0_i32_0 = arith.constant 0 : i32
    return %arg0, %c0_i32 : i32, i32
  }
}

</mosaic_0001>

<llo_original>
// kernel: encoder_forward.1
$region0: #{encoder_forward.1}
  #allocation0 [shape = 'u32[]', space=smem, size = 0x4, offset = 0x4, fixed_abs, tag = 'smem constant byte address 0x4 - core index']
  #allocation1 [shape = 'u32[72,128]{1,0:T(1,128)}', space=vmem, size = 0x9000, scoped, tag = 'internal scratch']
  #allocation2 [shape = 'f32[8,32]{1,0:T(8,128)}', space=vmem, size = 0x1000, scoped, tag = 'scratch operand']
  %s0 = inlined_call_operand.vmem [shape: f32[2,8,32], index: 0, kind: input, shape index: {}]
  %s1 = inlined_call_operand.vmem [shape: f32[8,32], index: 1, kind: input, shape index: {}]
  %s2 = inlined_call_operand.vmem [shape: f32[2,1,8], index: 2, kind: input, shape index: {}]
  %s3 = inlined_call_operand.vmem [shape: bf16[2,32,96], index: 3, kind: input, shape index: {}]
  %s4 = inlined_call_operand.vmem [shape: bf16[2,32,32], index: 4, kind: input, shape index: {}]
  %s5 = inlined_call_operand.vmem [shape: bf16[2,32,64], index: 5, kind: input, shape index: {}]
  %s6 = inlined_call_operand.vmem [shape: bf16[2,64,32], index: 6, kind: input, shape index: {}]
  %s7 = inlined_call_operand.vmem [shape: f32[2,1,96], index: 7, kind: input, shape index: {}]
  %s8 = inlined_call_operand.vmem [shape: f32[2,6,32], index: 8, kind: input, shape index: {}]
  %s9 = inlined_call_operand.vmem [shape: f32[2,1,64], index: 9, kind: input, shape index: {}]
  %s10 = inlined_call_operand.hbm [shape: f32[16,32], index: 10, kind: output, shape index: {}]
  %s11 = sld [smem:[#allocation0]]
  $region81: #{encoder_forward.1} parent=0
    _
  %s13 = ssub.s32 1, %s11
  %s14 = scalar_select 0, %s13, %s11
  $region1: #{encoder_forward.1} parent=0
    #allocation3 [shape = 'u8[8192]{0}', space=vmem, size = 0x2000, scoped, tag = 'output window, operand 0']
    #allocation4 [shape = 's32[2]{0}', space=sflag, size = 0x8, scoped, tag = 'scoped memory for encoder_forward.1']
    %15 = vsyncpa [#allocation4], 0
    %s16 = scalar_lea.sflag [#allocation4], 1
    %17 = vsyncpa %s16, 0
    loop: start=0, step=1, limit=6
    $region2: #{encoder_forward.1} parent=1 // loop_pre_header
      _
    $region3: #{encoder_forward.1} parent=1 // loop_header
      %s19 = sphi 0, %s23
      %p20 = scmp.ge.s32.totalorder %s19, 6
      %s26 = sphi 0, %s38
      %s27 = sphi 0, %s34
      %s28 = sphi 0, %s26
      %s29 = sphi 0, %s27
      %s30 = sphi 0, %s28
      %s31 = sphi 0, %s29
      %s41 = sphi 0, %s43
      %s44 = sphi 0, %s41
      %s45 = sphi 0, %s44
      %s61 = sphi 0, %s45
      %s65 = sphi 0, %s65
      %s67 = sphi 0, %s65
      %s68 = sphi 0, %s67
      %s82 = sphi 0, %s68
      %s88 = sphi 0, %s90
      %s91 = sphi 0, %s88
      %s92 = sphi 0, %s91
      %s108 = sphi 0, %s92
      %s114 = sphi 0, %s116
      %s117 = sphi 0, %s114
      %s118 = sphi 0, %s117
      %s134 = sphi 0, %s118
      %s140 = sphi 0, %s142
      %s143 = sphi 0, %s140
      %s144 = sphi 0, %s143
      %s160 = sphi 0, %s144
      %s166 = sphi 0, %s168
      %s169 = sphi 0, %s166
      %s170 = sphi 0, %s169
      %s186 = sphi 0, %s170
      %s192 = sphi 0, %s194
      %s195 = sphi 0, %s192
      %s196 = sphi 0, %s195
      %s212 = sphi 0, %s196
      %s218 = sphi 0, %s220
      %s221 = sphi 0, %s218
      %s222 = sphi 0, %s221
      %s238 = sphi 0, %s222
      %s244 = sphi 0, %s246
      %s247 = sphi 0, %s244
      %s248 = sphi 0, %s247
      %s264 = sphi 0, %s248
      %s270 = sphi 0, %s272
      %s273 = sphi 0, %s270
      %s274 = sphi 0, %s273
      %s290 = sphi 0, %s274
      %s296 = sphi 0, %s298
      %s299 = sphi 0, %s296
      %s300 = sphi 0, %s299
      %s316 = sphi 0, %s300
    $region4: #{encoder_forward.1} parent=1 // loop_header_branch
      %22 = sbr.rel (%p20) target = $region8
    $region5: #{encoder_forward.1} parent=1 // loop_body
      %s24 = ssub.s32 %s19, 1
      %s25 = ssub.s32 %s19, 2
      %s32 = sadd.s32 1, %s27
      %p33 = scmp.ge.s32.totalorder %s32, 2
      %s34 = scalar_select %p33, 0, %s32
      %s35 = sadd.s32 1, %s26
      %s36 = scalar_select %p33, %s35, %s26
      %p37 = scmp.ge.s32.totalorder %s36, 2
      %s38 = scalar_select %p37, 0, %s36
      %s39 = ssub.s32 %s26, %s38
      %p40 = scmp.eq.s32.totalorder %s39, 0
      %s42 = sadd.s32 %s41, 1
      %s43 = scalar_select %p40, %s41, %s42
      %p46 = pneg %p40
      %p47 = scmp.eq.s32.totalorder %s19, 3
      %p48 = por %p46, %p47
      %p49 = scmp.ne.s32.totalorder %s41, %s44
      %p50 = scmp.eq.s32.totalorder %s19, 0
      %p51 = por %p49, %p50
      %p52 = scmp.ne.s32.totalorder %s41, %s44
      %p53 = scmp.eq.s32.totalorder %s24, 3
      %p54 = por %p52, %p53
      %p55 = scmp.ne.s32.totalorder %s44, %s45
      %p56 = scmp.eq.s32.totalorder %s24, 0
      %p57 = por %p55, %p56
      %p58 = scmp.ne.s32.totalorder %s44, %s45
      %p59 = scmp.eq.s32.totalorder %s25, 3
      %p60 = por %p58, %p59
      %p62 = scmp.ne.s32.totalorder %s45, %s61
      %p63 = scmp.eq.s32.totalorder %s25, 0
      %p64 = por %p62, %p63
      %s66 = sadd.s32 %s65, 1
      %p69 = scmp.eq.s32.totalorder %s19, 3
      %p70 = scmp.ne.s32.totalorder %s65, %s67
      %p71 = scmp.eq.s32.totalorder %s19, 0
      %p72 = por %p70, %p71
      %p73 = scmp.ne.s32.totalorder %s65, %s67
      %p74 = scmp.eq.s32.totalorder %s24, 3
      %p75 = por %p73, %p74
      %p76 = scmp.ne.s32.totalorder %s67, %s68
      %p77 = scmp.eq.s32.totalorder %s24, 0
      %p78 = por %p76, %p77
      %p79 = scmp.ne.s32.totalorder %s67, %s68
      %p80 = scmp.eq.s32.totalorder %s25, 3
      %p81 = por %p79, %p80
      %p83 = scmp.ne.s32.totalorder %s68, %s82
      %p84 = scmp.eq.s32.totalorder %s25, 0
      %p85 = por %p83, %p84
      %s86 = ssub.s32 %s26, %s38
      %p87 = scmp.eq.s32.totalorder %s86, 0
      %s89 = sadd.s32 %s88, 1
      %s90 = scalar_select %p87, %s88, %s89
      %p93 = pneg %p87
      %p94 = scmp.eq.s32.totalorder %s19, 3
      %p95 = por %p93, %p94
      %p96 = scmp.ne.s32.totalorder %s88, %s91
      %p97 = scmp.eq.s32.totalorder %s19, 0
      %p98 = por %p96, %p97
      %p99 = scmp.ne.s32.totalorder %s88, %s91
      %p100 = scmp.eq.s32.totalorder %s24, 3
      %p101 = por %p99, %p100
      %p102 = scmp.ne.s32.totalorder %s91, %s92
      %p103 = scmp.eq.s32.totalorder %s24, 0
      %p104 = por %p102, %p103
      %p105 = scmp.ne.s32.totalorder %s91, %s92
      %p106 = scmp.eq.s32.totalorder %s25, 3
      %p107 = por %p105, %p106
      %p109 = scmp.ne.s32.totalorder %s92, %s108
      %p110 = scmp.eq.s32.totalorder %s25, 0
      %p111 = por %p109, %p110
      %s112 = ssub.s32 %s27, %s34
      %p113 = scmp.eq.s32.totalorder %s112, 0
      %s115 = sadd.s32 %s114, 1
      %s116 = scalar_select %p113, %s114, %s115
      %p119 = pneg %p113
      %p120 = scmp.eq.s32.totalorder %s19, 3
      %p121 = por %p119, %p120
      %p122 = scmp.ne.s32.totalorder %s114, %s117
      %p123 = scmp.eq.s32.totalorder %s19, 0
      %p124 = por %p122, %p123
      %p125 = scmp.ne.s32.totalorder %s114, %s117
      %p126 = scmp.eq.s32.totalorder %s24, 3
      %p127 = por %p125, %p126
      %p128 = scmp.ne.s32.totalorder %s117, %s118
      %p129 = scmp.eq.s32.totalorder %s24, 0
      %p130 = por %p128, %p129
      %p131 = scmp.ne.s32.totalorder %s117, %s118
      %p132 = scmp.eq.s32.totalorder %s25, 3
      %p133 = por %p131, %p132
      %p135 = scmp.ne.s32.totalorder %s118, %s134
      %p136 = scmp.eq.s32.totalorder %s25, 0
      %p137 = por %p135, %p136
      %s138 = ssub.s32 %s27, %s34
      %p139 = scmp.eq.s32.totalorder %s138, 0
      %s141 = sadd.s32 %s140, 1
      %s142 = scalar_select %p139, %s140, %s141
      %p145 = pneg %p139
      %p146 = scmp.eq.s32.totalorder %s19, 3
      %p147 = por %p145, %p146
      %p148 = scmp.ne.s32.totalorder %s140, %s143
      %p149 = scmp.eq.s32.totalorder %s19, 0
      %p150 = por %p148, %p149
      %p151 = scmp.ne.s32.totalorder %s140, %s143
      %p152 = scmp.eq.s32.totalorder %s24, 3
      %p153 = por %p151, %p152
      %p154 = scmp.ne.s32.totalorder %s143, %s144
      %p155 = scmp.eq.s32.totalorder %s24, 0
      %p156 = por %p154, %p155
      %p157 = scmp.ne.s32.totalorder %s143, %s144
      %p158 = scmp.eq.s32.totalorder %s25, 3
      %p159 = por %p157, %p158
      %p161 = scmp.ne.s32.totalorder %s144, %s160
      %p162 = scmp.eq.s32.totalorder %s25, 0
      %p163 = por %p161, %p162
      %s164 = ssub.s32 %s27, %s34
      %p165 = scmp.eq.s32.totalorder %s164, 0
      %s167 = sadd.s32 %s166, 1
      %s168 = scalar_select %p165, %s166, %s167
      %p171 = pneg %p165
      %p172 = scmp.eq.s32.totalorder %s19, 3
      %p173 = por %p171, %p172
      %p174 = scmp.ne.s32.totalorder %s166, %s169
      %p175 = scmp.eq.s32.totalorder %s19, 0
      %p176 = por %p174, %p175
      %p177 = scmp.ne.s32.totalorder %s166, %s169
      %p178 = scmp.eq.s32.totalorder %s24, 3
      %p179 = por %p177, %p178
      %p180 = scmp.ne.s32.totalorder %s169, %s170
      %p181 = scmp.eq.s32.totalorder %s24, 0
      %p182 = por %p180, %p181
      %p183 = scmp.ne.s32.totalorder %s169, %s170
      %p184 = scmp.eq.s32.totalorder %s25, 3
      %p185 = por %p183, %p184
      %p187 = scmp.ne.s32.totalorder %s170, %s186
      %p188 = scmp.eq.s32.totalorder %s25, 0
      %p189 = por %p187, %p188
      %s190 = ssub.s32 %s27, %s34
      %p191 = scmp.eq.s32.totalorder %s190, 0
      %s193 = sadd.s32 %s192, 1
      %s194 = scalar_select %p191, %s192, %s193
      %p197 = pneg %p191
      %p198 = scmp.eq.s32.totalorder %s19, 3
      %p199 = por %p197, %p198
      %p200 = scmp.ne.s32.totalorder %s192, %s195
      %p201 = scmp.eq.s32.totalorder %s19, 0
      %p202 = por %p200, %p201
      %p203 = scmp.ne.s32.totalorder %s192, %s195
      %p204 = scmp.eq.s32.totalorder %s24, 3
      %p205 = por %p203, %p204
      %p206 = scmp.ne.s32.totalorder %s195, %s196
      %p207 = scmp.eq.s32.totalorder %s24, 0
      %p208 = por %p206, %p207
      %p209 = scmp.ne.s32.totalorder %s195, %s196
      %p210 = scmp.eq.s32.totalorder %s25, 3
      %p211 = por %p209, %p210
      %p213 = scmp.ne.s32.totalorder %s196, %s212
      %p214 = scmp.eq.s32.totalorder %s25, 0
      %p215 = por %p213, %p214
      %s216 = ssub.s32 %s27, %s34
      %p217 = scmp.eq.s32.totalorder %s216, 0
      %s219 = sadd.s32 %s218, 1
      %s220 = scalar_select %p217, %s218, %s219
      %p223 = pneg %p217
      %p224 = scmp.eq.s32.totalorder %s19, 3
      %p225 = por %p223, %p224
      %p226 = scmp.ne.s32.totalorder %s218, %s221
      %p227 = scmp.eq.s32.totalorder %s19, 0
      %p228 = por %p226, %p227
      %p229 = scmp.ne.s32.totalorder %s218, %s221
      %p230 = scmp.eq.s32.totalorder %s24, 3
      %p231 = por %p229, %p230
      %p232 = scmp.ne.s32.totalorder %s221, %s222
      %p233 = scmp.eq.s32.totalorder %s24, 0
      %p234 = por %p232, %p233
      %p235 = scmp.ne.s32.totalorder %s221, %s222
      %p236 = scmp.eq.s32.totalorder %s25, 3
      %p237 = por %p235, %p236
      %p239 = scmp.ne.s32.totalorder %s222, %s238
      %p240 = scmp.eq.s32.totalorder %s25, 0
      %p241 = por %p239, %p240
      %s242 = ssub.s32 %s27, %s34
      %p243 = scmp.eq.s32.totalorder %s242, 0
      %s245 = sadd.s32 %s244, 1
      %s246 = scalar_select %p243, %s244, %s245
      %p249 = pneg %p243
      %p250 = scmp.eq.s32.totalorder %s19, 3
      %p251 = por %p249, %p250
      %p252 = scmp.ne.s32.totalorder %s244, %s247
      %p253 = scmp.eq.s32.totalorder %s19, 0
      %p254 = por %p252, %p253
      %p255 = scmp.ne.s32.totalorder %s244, %s247
      %p256 = scmp.eq.s32.totalorder %s24, 3
      %p257 = por %p255, %p256
      %p258 = scmp.ne.s32.totalorder %s247, %s248
      %p259 = scmp.eq.s32.totalorder %s24, 0
      %p260 = por %p258, %p259
      %p261 = scmp.ne.s32.totalorder %s247, %s248
      %p262 = scmp.eq.s32.totalorder %s25, 3
      %p263 = por %p261, %p262
      %p265 = scmp.ne.s32.totalorder %s248, %s264
      %p266 = scmp.eq.s32.totalorder %s25, 0
      %p267 = por %p265, %p266
      %s268 = ssub.s32 %s27, %s34
      %p269 = scmp.eq.s32.totalorder %s268, 0
      %s271 = sadd.s32 %s270, 1
      %s272 = scalar_select %p269, %s270, %s271
      %p275 = pneg %p269
      %p276 = scmp.eq.s32.totalorder %s19, 3
      %p277 = por %p275, %p276
      %p278 = scmp.ne.s32.totalorder %s270, %s273
      %p279 = scmp.eq.s32.totalorder %s19, 0
      %p280 = por %p278, %p279
      %p281 = scmp.ne.s32.totalorder %s270, %s273
      %p282 = scmp.eq.s32.totalorder %s24, 3
      %p283 = por %p281, %p282
      %p284 = scmp.ne.s32.totalorder %s273, %s274
      %p285 = scmp.eq.s32.totalorder %s24, 0
      %p286 = por %p284, %p285
      %p287 = scmp.ne.s32.totalorder %s273, %s274
      %p288 = scmp.eq.s32.totalorder %s25, 3
      %p289 = por %p287, %p288
      %p291 = scmp.ne.s32.totalorder %s274, %s290
      %p292 = scmp.eq.s32.totalorder %s25, 0
      %p293 = por %p291, %p292
      %s294 = ssub.s32 %s26, %s38
      %p295 = scmp.eq.s32.totalorder %s294, 0
      %s297 = sadd.s32 %s296, 1
      %s298 = scalar_select %p295, %s296, %s297
      %p301 = pneg %p295
      %p302 = scmp.eq.s32.totalorder %s19, 3
      %p303 = por %p301, %p302
      %p304 = scmp.ne.s32.totalorder %s296, %s299
      %p305 = scmp.eq.s32.totalorder %s19, 0
      %p306 = por %p304, %p305
      %p307 = scmp.ne.s32.totalorder %s296, %s299
      %p308 = scmp.eq.s32.totalorder %s24, 3
      %p309 = por %p307, %p308
      %p310 = scmp.ne.s32.totalorder %s299, %s300
      %p311 = scmp.eq.s32.totalorder %s24, 0
      %p312 = por %p310, %p311
      %p313 = scmp.ne.s32.totalorder %s299, %s300
      %p314 = scmp.eq.s32.totalorder %s25, 3
      %p315 = por %p313, %p314
      %p317 = scmp.ne.s32.totalorder %s300, %s316
      %p318 = scmp.eq.s32.totalorder %s25, 0
      %p319 = por %p317, %p318
      %p320 = scmp.le.s32.totalorder 1, %s19
      %p321 = scmp.lt.s32.totalorder %s19, 5
      %p322 = pnand %p320, %p321
      %p323 = pneg %p322
      // Predicated region
      $region9: #{encoder_forward.1} parent=5 // pred_check
        _
      $region10: #{encoder_forward.1} parent=5 // pred_check_branch
        %325 = sbr.rel (%p322) target = $region12
      $region11: #{encoder_forward.1} parent=5 // pred_region
        %s326 = ssub.s32 %s19, 1
        // Predicated region
        $region13: #{encoder_forward.1} parent=11 // pred_check
          %p327 = pneg %p78
        $region14: #{encoder_forward.1} parent=11 // pred_check_branch
          %329 = sbr.rel (%p327) target = $region16
        $region15: #{encoder_forward.1} parent=11 // pred_region
          _
        $region16: #{encoder_forward.1} parent=11 // pred_fallthru
          _
      $region12: #{encoder_forward.1} parent=5 // pred_fallthru
        _
      %p330 = scmp.lt.s32.totalorder %s19, 4
      // Predicated region
      $region17: #{encoder_forward.1} parent=5 // pred_check
        %p331 = pneg %p330
      $region18: #{encoder_forward.1} parent=5 // pred_check_branch
        %333 = sbr.rel (%p331) target = $region20
      $region19: #{encoder_forward.1} parent=5 // pred_region
        // Predicated region
        $region21: #{encoder_forward.1} parent=19 // pred_check
          %p334 = pneg %p51
        $region22: #{encoder_forward.1} parent=19 // pred_check_branch
          %336 = sbr.rel (%p334) target = $region24
        $region23: #{encoder_forward.1} parent=19 // pred_region
          %p337 = scmp.lt.s32.totalorder %s26, 1
          %s338 = scalar_select %p337, %s26, 1
          %s339 = smul.addr %s338, 8
          %s340 = scalar_lea.vmem %s0, %s339
        $region24: #{encoder_forward.1} parent=19 // pred_fallthru
          _
        // Predicated region
        $region25: #{encoder_forward.1} parent=19 // pred_check
          %p341 = pneg %p98
        $region26: #{encoder_forward.1} parent=19 // pred_check_branch
          %343 = sbr.rel (%p341) target = $region28
        $region27: #{encoder_forward.1} parent=19 // pred_region
          %p344 = scmp.lt.s32.totalorder %s26, 1
          %s345 = scalar_select %p344, %s26, 1
          %s346 = scalar_lea.vmem %s2, %s345
        $region28: #{encoder_forward.1} parent=19 // pred_fallthru
          _
        // Predicated region
        $region29: #{encoder_forward.1} parent=19 // pred_check
          %p347 = pneg %p124
        $region30: #{encoder_forward.1} parent=19 // pred_check_branch
          %349 = sbr.rel (%p347) target = $region32
        $region31: #{encoder_forward.1} parent=19 // pred_region
          %p350 = scmp.lt.s32.totalorder %s27, 1
          %s351 = scalar_select %p350, %s27, 1
          %s352 = smul.addr %s351, 4
          %s353 = smul.addr %s352, 4
          %s354 = scalar_lea.vmem %s3, %s353
        $region32: #{encoder_forward.1} parent=19 // pred_fallthru
          _
        // Predicated region
        $region33: #{encoder_forward.1} parent=19 // pred_check
          %p355 = pneg %p150
        $region34: #{encoder_forward.1} parent=19 // pred_check_branch
          %357 = sbr.rel (%p355) target = $region36
        $region35: #{encoder_forward.1} parent=19 // pred_region
          %p358 = scmp.lt.s32.totalorder %s27, 1
          %s359 = scalar_select %p358, %s27, 1
          %s360 = smul.addr %s359, 4
          %s361 = smul.addr %s360, 4
          %s362 = scalar_lea.vmem %s4, %s361
        $region36: #{encoder_forward.1} parent=19 // pred_fallthru
          _
        // Predicated region
        $region37: #{encoder_forward.1} parent=19 // pred_check
          %p363 = pneg %p176
        $region38: #{encoder_forward.1} parent=19 // pred_check_branch
          %365 = sbr.rel (%p363) target = $region40
        $region39: #{encoder_forward.1} parent=19 // pred_region
          %p366 = scmp.lt.s32.totalorder %s27, 1
          %s367 = scalar_select %p366, %s27, 1
          %s368 = smul.addr %s367, 4
          %s369 = smul.addr %s368, 4
          %s370 = scalar_lea.vmem %s5, %s369
        $region40: #{encoder_forward.1} parent=19 // pred_fallthru
          _
        // Predicated region
        $region41: #{encoder_forward.1} parent=19 // pred_check
          %p371 = pneg %p202
        $region42: #{encoder_forward.1} parent=19 // pred_check_branch
          %373 = sbr.rel (%p371) target = $region44
        $region43: #{encoder_forward.1} parent=19 // pred_region
          %p374 = scmp.lt.s32.totalorder %s27, 1
          %s375 = scalar_select %p374, %s27, 1
          %s376 = smul.addr %s375, 8
          %s377 = smul.addr %s376, 4
          %s378 = scalar_lea.vmem %s6, %s377
        $region44: #{encoder_forward.1} parent=19 // pred_fallthru
          _
        // Predicated region
        $region45: #{encoder_forward.1} parent=19 // pred_check
          %p379 = pneg %p228
        $region46: #{encoder_forward.1} parent=19 // pred_check_branch
          %381 = sbr.rel (%p379) target = $region48
        $region47: #{encoder_forward.1} parent=19 // pred_region
          %p382 = scmp.lt.s32.totalorder %s27, 1
          %s383 = scalar_select %p382, %s27, 1
          %s384 = scalar_lea.vmem %s7, %s383
        $region48: #{encoder_forward.1} parent=19 // pred_fallthru
          _
        // Predicated region
        $region49: #{encoder_forward.1} parent=19 // pred_check
          %p385 = pneg %p254
        $region50: #{encoder_forward.1} parent=19 // pred_check_branch
          %387 = sbr.rel (%p385) target = $region52
        $region51: #{encoder_forward.1} parent=19 // pred_region
          %p388 = scmp.lt.s32.totalorder %s27, 1
          %s389 = scalar_select %p388, %s27, 1
          %s390 = smul.addr %s389, 8
          %s391 = scalar_lea.vmem %s8, %s390
        $region52: #{encoder_forward.1} parent=19 // pred_fallthru
          _
        // Predicated region
        $region53: #{encoder_forward.1} parent=19 // pred_check
          %p392 = pneg %p280
        $region54: #{encoder_forward.1} parent=19 // pred_check_branch
          %394 = sbr.rel (%p392) target = $region56
        $region55: #{encoder_forward.1} parent=19 // pred_region
          %p395 = scmp.lt.s32.totalorder %s27, 1
          %s396 = scalar_select %p395, %s27, 1
          %s397 = scalar_lea.vmem %s9, %s396
        $region56: #{encoder_forward.1} parent=19 // pred_fallthru
          _
      $region20: #{encoder_forward.1} parent=5 // pred_fallthru
        _
      %p398 = scmp.le.s32.totalorder 1, %s19
      %p399 = scmp.lt.s32.totalorder %s19, 5
      %p400 = pnand %p398, %p399
      %p401 = pneg %p400
      // Predicated region
      $region57: #{encoder_forward.1} parent=5 // pred_check
        _
      $region58: #{encoder_forward.1} parent=5 // pred_check_branch
        %403 = sbr.rel (%p400) target = $region60
      $region59: #{encoder_forward.1} parent=5 // pred_region
        %s404 = ssub.s32 %s19, 1
        %p405 = scmp.lt.s32.totalorder %s28, 1
        %s406 = scalar_select %p405, %s28, 1
        %s407 = smul.addr %s406, 8
        %s408 = scalar_lea.vmem %s0, %s407
        %p409 = pneg %p57
        %p410 = pneg %p54
        %p411 = pneg %p78
        %p412 = pneg %p75
        %p413 = scmp.lt.s32.totalorder %s28, 1
        %s414 = scalar_select %p413, %s28, 1
        %s415 = scalar_lea.vmem %s2, %s414
        %p416 = pneg %p104
        %p417 = pneg %p101
        %p418 = scmp.lt.s32.totalorder %s29, 1
        %s419 = scalar_select %p418, %s29, 1
        %s420 = smul.addr %s419, 4
        %s421 = smul.addr %s420, 4
        %s422 = scalar_lea.vmem %s3, %s421
        %p423 = pneg %p130
        %p424 = pneg %p127
        %p425 = scmp.lt.s32.totalorder %s29, 1
        %s426 = scalar_select %p425, %s29, 1
        %s427 = smul.addr %s426, 4
        %s428 = smul.addr %s427, 4
        %s429 = scalar_lea.vmem %s4, %s428
        %p430 = pneg %p156
        %p431 = pneg %p153
        %p432 = scmp.lt.s32.totalorder %s29, 1
        %s433 = scalar_select %p432, %s29, 1
        %s434 = smul.addr %s433, 4
        %s435 = smul.addr %s434, 4
        %s436 = scalar_lea.vmem %s5, %s435
        %p437 = pneg %p182
        %p438 = pneg %p179
        %p439 = scmp.lt.s32.totalorder %s29, 1
        %s440 = scalar_select %p439, %s29, 1
        %s441 = smul.addr %s440, 8
        %s442 = smul.addr %s441, 4
        %s443 = scalar_lea.vmem %s6, %s442
        %p444 = pneg %p208
        %p445 = pneg %p205
        %p446 = scmp.lt.s32.totalorder %s29, 1
        %s447 = scalar_select %p446, %s29, 1
        %s448 = scalar_lea.vmem %s7, %s447
        %p449 = pneg %p234
        %p450 = pneg %p231
        %p451 = scmp.lt.s32.totalorder %s29, 1
        %s452 = scalar_select %p451, %s29, 1
        %s453 = smul.addr %s452, 8
        %s454 = scalar_lea.vmem %s8, %s453
        %p455 = pneg %p260
        %p456 = pneg %p257
        %p457 = scmp.lt.s32.totalorder %s29, 1
        %s458 = scalar_select %p457, %s29, 1
        %s459 = scalar_lea.vmem %s9, %s458
        %p460 = pneg %p286
        %p461 = pneg %p283
        %p462 = pneg %p312
        %p463 = pneg %p309
        %s464 = sand.u32 %s299, 1
        %s465 = scalar_lea.sflag [#allocation4], %s464
        %s466 = sand.u32 %s299, 1
        %s467 = smul.addr %s466, 8
        %s468 = scalar_lea.vmem [#allocation3], %s467
        %p469 = scmp.lt.s32.totalorder %s28, 1
        %s470 = scalar_select %p469, %s28, 1
        %s471 = smul.addr %s470, 8
        %s472 = scalar_lea.vmem %s0, %s471
        %p473 = scmp.lt.s32.totalorder %s28, 1
        %s474 = scalar_select %p473, %s28, 1
        %s475 = scalar_lea.vmem %s2, %s474
        %p476 = scmp.lt.s32.totalorder %s29, 1
        %s477 = scalar_select %p476, %s29, 1
        %s478 = smul.addr %s477, 4
        %s479 = smul.addr %s478, 4
        %s480 = scalar_lea.vmem %s3, %s479
        %p481 = scmp.lt.s32.totalorder %s29, 1
        %s482 = scalar_select %p481, %s29, 1
        %s483 = smul.addr %s482, 4
        %s484 = smul.addr %s483, 4
        %s485 = scalar_lea.vmem %s4, %s484
        %p486 = scmp.lt.s32.totalorder %s29, 1
        %s487 = scalar_select %p486, %s29, 1
        %s488 = smul.addr %s487, 4
        %s489 = smul.addr %s488, 4
        %s490 = scalar_lea.vmem %s5, %s489
        %p491 = scmp.lt.s32.totalorder %s29, 1
        %s492 = scalar_select %p491, %s29, 1
        %s493 = smul.addr %s492, 8
        %s494 = smul.addr %s493, 4
        %s495 = scalar_lea.vmem %s6, %s494
        %p496 = scmp.lt.s32.totalorder %s29, 1
        %s497 = scalar_select %p496, %s29, 1
        %s498 = scalar_lea.vmem %s7, %s497
        %p499 = scmp.lt.s32.totalorder %s29, 1
        %s500 = scalar_select %p499, %s29, 1
        %s501 = smul.addr %s500, 8
        %s502 = scalar_lea.vmem %s8, %s501
        %p503 = scmp.lt.s32.totalorder %s29, 1
        %s504 = scalar_select %p503, %s29, 1
        %s505 = scalar_lea.vmem %s9, %s504
        %p507 = scmp.eq.s32.totalorder %s29, 0
        // Predicated region
        $region61: #{encoder_forward.1} parent=59 // pred_check
          %p508 = pneg %p507
        $region62: #{encoder_forward.1} parent=59 // pred_check_branch
          %510 = sbr.rel (%p508) target = $region64
        $region63: #{encoder_forward.1} parent=59 // pred_region
          %v511 = vld [vmem:[%s472] sm:$0xff]
          %v512 = vmul.f32 %v511, 5.656854
          %v513 = vld [vmem:[%s1] sm:$0xff]
          %v514 = vadd.f32 %v512, %v513
          %vm515 = vcmask 261120
          %516 = vst.msk [vmem:[#allocation2] sm:$0xff] %vm515, %v514
        $region64: #{encoder_forward.1} parent=59 // pred_fallthru
          _
        %v517 = vld [vmem:[#allocation2] sm:$0xff]
        %v518 = vld [vmem:[%s475] sm:$0x1]
        %v519 = vld [vmem:[%s480] sm:$0xf]
        %v520 = vld [vmem:[%s480 + $0x4] sm:$0xf]
        %v521 = vld [vmem:[%s480 + $0x8] sm:$0xf]
        %v522 = vld [vmem:[%s480 + $0xc] sm:$0xf]
        %v523 = vld [vmem:[%s485] sm:$0xf]
        %v524 = vld [vmem:[%s485 + $0x4] sm:$0xf]
        %v525 = vld [vmem:[%s485 + $0x8] sm:$0xf]
        %v526 = vld [vmem:[%s485 + $0xc] sm:$0xf]
        %v527 = vld [vmem:[%s490] sm:$0xf]
        %v528 = vld [vmem:[%s490 + $0x4] sm:$0xf]
        %v529 = vld [vmem:[%s490 + $0x8] sm:$0xf]
        %v530 = vld [vmem:[%s490 + $0xc] sm:$0xf]
        %v531 = vld [vmem:[%s495] sm:$0xf]
        %v532 = vld [vmem:[%s495 + $0x4] sm:$0xf]
        %v533 = vld [vmem:[%s495 + $0x8] sm:$0xf]
        %v534 = vld [vmem:[%s495 + $0xc] sm:$0xf]
        %v535 = vld [vmem:[%s495 + $0x10] sm:$0xf]
        %v536 = vld [vmem:[%s495 + $0x14] sm:$0xf]
        %v537 = vld [vmem:[%s495 + $0x18] sm:$0xf]
        %v538 = vld [vmem:[%s495 + $0x1c] sm:$0xf]
        %v539 = vld [vmem:[%s498] sm:$0x1]
        %v540 = vld [vmem:[%s502] sm:$0x3f]
        %v541 = vld [vmem:[%s505] sm:$0x1]
        %v542 = vpack.c.bf16 %v517, %v517
        %v544 = vperm.slane %v539, 0
        %v550 = vunpack.c.l.b16 %v519
        %v551 = vunpack.c.l.b16 %v520
        %v552 = vunpack.c.l.b16 %v521
        %v553 = vunpack.c.l.b16 %v522
        %v554 = vpack.c.b16 %v551, %v550
        %v555 = vpack.c.b16 %v553, %v552
        %vm558 = vcmask 261120
        %v560 = vsel %vm558, %v542, 0
        %562 = vmatpush.bf16.msra.mxu0 0
        %563 = vmatpush.bf16.msra.mxu0 0
        %564 = vmatpush.bf16.msra.mxu0 0
        %565 = vmatpush.bf16.msra.mxu0 0
        %566 = vmatpush.bf16.msra.mxu0 0
        %567 = vmatpush.bf16.msra.mxu0 0
        %568 = vmatpush.bf16.msra.mxu0 %v555
        %569 = vmatpush.bf16.msra.mxu0 %v554
        %570 = vmatmul.bf16.gmra.mxu0 %v560
        %v571 = vpop.f32.mrf.mxu0
        %v572 = vadd.f32 %v544, %v571
        %v573 = vpop.f32.mrf.mxu0
        %574 = vdwg.mxu0
        %576 = vrot.lane.b32.xlu0 %v572, 120
        %v577 = vpop.permute.xlu0 %576
        %579 = vrot.lane.b32.xlu0 %v572, 112
        %v580 = vpop.permute.xlu0 %579
        %582 = vrot.lane.b32.xlu0 %v572, 104
        %v583 = vpop.permute.xlu0 %582
        %v585 = vpack.c.bf16 %v572, %v572
        %v586 = vpack.c.bf16 %v577, %v577
        %v587 = vpack.c.bf16 %v580, %v580
        %v588 = vpack.c.bf16 %v583, %v583
        %v590 = vperm.slane %v518, 0
        %v593 = vunpack.c.l.b16 %v585
        %v594 = vpack.c.b16 %v593, %v593
        %595 = vrot.lane.b32.xlu0 %v594, 96
        %v596 = vpop.permute.xlu0 %595
        %vm597 = vcmask 64512
        %v599 = vsel %vm597, %v585, 0
        %v602 = vsel %vm597, %v596, 0
        %604 = vmatpush.bf16.xpose.msra.mxu0 0
        %605 = vmatpush.bf16.xpose.msra.mxu0 0
        %606 = vmatpush.bf16.xpose.msra.mxu0 0
        %607 = vmatpush.bf16.xpose.msra.mxu0 0
        %608 = vmatpush.bf16.xpose.msra.mxu0 0
        %609 = vmatpush.bf16.xpose.msra.mxu0 0
        %610 = vmatpush.bf16.xpose.msra.mxu0 0
        %611 = vmatpush.bf16.xpose.msra.mxu0 %v602
        %612 = vmatmul.bf16.gmra.mxu0 %v599
        %v613 = vpop.f32.mrf.mxu0
        %v614 = vadd.f32 %v590, %v613
        %v615 = vpop.f32.mrf.mxu0
        %616 = vdwg.mxu0
        %v618 = vunpack.c.l.b16 %v586
        %v619 = vpack.c.b16 %v618, %v618
        %620 = vrot.lane.b32.xlu0 %v619, 96
        %v621 = vpop.permute.xlu0 %620
        %v623 = vsel %vm597, %v586, 0
        %v626 = vsel %vm597, %v621, 0
        %628 = vmatpush.bf16.xpose.msra.mxu0 0
        %629 = vmatpush.bf16.xpose.msra.mxu0 0
        %630 = vmatpush.bf16.xpose.msra.mxu0 0
        %631 = vmatpush.bf16.xpose.msra.mxu0 0
        %632 = vmatpush.bf16.xpose.msra.mxu0 0
        %633 = vmatpush.bf16.xpose.msra.mxu0 0
        %634 = vmatpush.bf16.xpose.msra.mxu0 0
        %635 = vmatpush.bf16.xpose.msra.mxu0 %v626
        %636 = vmatmul.bf16.gmra.mxu0 %v623
        %v637 = vpop.f32.mrf.mxu0
        %v638 = vadd.f32 %v590, %v637
        %v639 = vpop.f32.mrf.mxu0
        %640 = vdwg.mxu0
        %v642 = vunpack.c.l.b16 %v587
        %v643 = vpack.c.b16 %v642, %v642
        %644 = vrot.lane.b32.xlu0 %v643, 96
        %v645 = vpop.permute.xlu0 %644
        %v647 = vsel %vm597, %v587, 0
        %v650 = vsel %vm597, %v645, 0
        %652 = vmatpush.bf16.xpose.msra.mxu0 0
        %653 = vmatpush.bf16.xpose.msra.mxu0 0
        %654 = vmatpush.bf16.xpose.msra.mxu0 0
        %655 = vmatpush.bf16.xpose.msra.mxu0 0
        %656 = vmatpush.bf16.xpose.msra.mxu0 0
        %657 = vmatpush.bf16.xpose.msra.mxu0 0
        %658 = vmatpush.bf16.xpose.msra.mxu0 0
        %659 = vmatpush.bf16.xpose.msra.mxu0 %v650
        %660 = vmatmul.bf16.gmra.mxu0 %v647
        %v661 = vpop.f32.mrf.mxu0
        %v662 = vadd.f32 %v590, %v661
        %v663 = vpop.f32.mrf.mxu0
        %664 = vdwg.mxu0
        %v666 = vunpack.c.l.b16 %v588
        %v667 = vpack.c.b16 %v666, %v666
        %668 = vrot.lane.b32.xlu0 %v667, 96
        %v669 = vpop.permute.xlu0 %668
        %v671 = vsel %vm597, %v588, 0
        %v674 = vsel %vm597, %v669, 0
        %676 = vmatpush.bf16.xpose.msra.mxu0 0
        %677 = vmatpush.bf16.xpose.msra.mxu0 0
        %678 = vmatpush.bf16.xpose.msra.mxu0 0
        %679 = vmatpush.bf16.xpose.msra.mxu0 0
        %680 = vmatpush.bf16.xpose.msra.mxu0 0
        %681 = vmatpush.bf16.xpose.msra.mxu0 0
        %682 = vmatpush.bf16.xpose.msra.mxu0 0
        %683 = vmatpush.bf16.xpose.msra.mxu0 %v674
        %684 = vmatmul.bf16.gmra.mxu0 %v671
        %v685 = vpop.f32.mrf.mxu0
        %v686 = vadd.f32 %v590, %v685
        %v687 = vpop.f32.mrf.mxu0
        %688 = vdwg.mxu0
        %v689 = vsel %vm597, %v614, -inf
        %690 = vmax.xlane.f32.xlu0 %v689
        %v691 = vpop.xlane.xlu0 %690
        %v692 = vsel %vm597, %v638, -inf
        %693 = vmax.xlane.f32.xlu0 %v692
        %v694 = vpop.xlane.xlu0 %693
        %v695 = vsel %vm597, %v662, -inf
        %696 = vmax.xlane.f32.xlu0 %v695
        %v697 = vpop.xlane.xlu0 %696
        %v698 = vsel %vm597, %v686, -inf
        %699 = vmax.xlane.f32.xlu0 %v698
        %v700 = vpop.xlane.xlu0 %699
        %v701 = vsub.f32 %v614, %v691
        %v702 = vsub.f32 %v638, %v694
        %v703 = vsub.f32 %v662, %v697
        %v704 = vsub.f32 %v686, %v700
        %v705 = vmul.f32 %v701, 1.442695
        %v706 = vpow.pop %v705
        %v707 = vmul.f32 %v702, 1.442695
        %v708 = vpow.pop %v707
        %v709 = vmul.f32 %v703, 1.442695
        %v710 = vpow.pop %v709
        %v711 = vmul.f32 %v704, 1.442695
        %v712 = vpow.pop %v711
        %v713 = vsel %vm597, %v706, 0.0
        %714 = vadd.xlane.f32.xlu0 %v713
        %v715 = vpop.xlane.xlu0 %714
        %v716 = vsel %vm597, %v708, 0.0
        %717 = vadd.xlane.f32.xlu0 %v716
        %v718 = vpop.xlane.xlu0 %717
        %v719 = vsel %vm597, %v710, 0.0
        %720 = vadd.xlane.f32.xlu0 %v719
        %v721 = vpop.xlane.xlu0 %720
        %v722 = vsel %vm597, %v712, 0.0
        %723 = vadd.xlane.f32.xlu0 %v722
        %v724 = vpop.xlane.xlu0 %723
        %v725 = vrcp.pop %v715
        %v726 = vmul.f32 %v715, %v725
        %v727 = vsub.f32 1.0, %v726
        %v728 = vmul.f32 %v725, %v727
        %v729 = vadd.f32 %v725, %v728
        %vm730 = vweird.f32 %v715
        %vm731 = vweird.f32 %v725
        %vm732 = vmor %vm730, %vm731
        %v733 = vsel %vm732, %v725, %v729
        %v734 = vand.u32 2147483647, %v715
        %vm735 = vcmp.eq.f32.partialorder %v734, 8.507059e+37
        %v736 = vand.u32 %v715, 2147483648
        %v737 = vor.u32 1.1754944e-38, %v736
        %v738 = vsel %vm735, %v737, %v733
        %v739 = vmul.f32 %v706, %v738
        %v740 = vrcp.pop %v718
        %v741 = vmul.f32 %v718, %v740
        %v742 = vsub.f32 1.0, %v741
        %v743 = vmul.f32 %v740, %v742
        %v744 = vadd.f32 %v740, %v743
        %vm745 = vweird.f32 %v718
        %vm746 = vweird.f32 %v740
        %vm747 = vmor %vm745, %vm746
        %v748 = vsel %vm747, %v740, %v744
        %v749 = vand.u32 2147483647, %v718
        %vm750 = vcmp.eq.f32.partialorder %v749, 8.507059e+37
        %v751 = vand.u32 %v718, 2147483648
        %v752 = vor.u32 1.1754944e-38, %v751
        %v753 = vsel %vm750, %v752, %v748
        %v754 = vmul.f32 %v708, %v753
        %v755 = vrcp.pop %v721
        %v756 = vmul.f32 %v721, %v755
        %v757 = vsub.f32 1.0, %v756
        %v758 = vmul.f32 %v755, %v757
        %v759 = vadd.f32 %v755, %v758
        %vm760 = vweird.f32 %v721
        %vm761 = vweird.f32 %v755
        %vm762 = vmor %vm760, %vm761
        %v763 = vsel %vm762, %v755, %v759
        %v764 = vand.u32 2147483647, %v721
        %vm765 = vcmp.eq.f32.partialorder %v764, 8.507059e+37
        %v766 = vand.u32 %v721, 2147483648
        %v767 = vor.u32 1.1754944e-38, %v766
        %v768 = vsel %vm765, %v767, %v763
        %v769 = vmul.f32 %v710, %v768
        %v770 = vrcp.pop %v724
        %v771 = vmul.f32 %v724, %v770
        %v772 = vsub.f32 1.0, %v771
        %v773 = vmul.f32 %v770, %v772
        %v774 = vadd.f32 %v770, %v773
        %vm775 = vweird.f32 %v724
        %vm776 = vweird.f32 %v770
        %vm777 = vmor %vm775, %vm776
        %v778 = vsel %vm777, %v770, %v774
        %v779 = vand.u32 2147483647, %v724
        %vm780 = vcmp.eq.f32.partialorder %v779, 8.507059e+37
        %v781 = vand.u32 %v724, 2147483648
        %v782 = vor.u32 1.1754944e-38, %v781
        %v783 = vsel %vm780, %v782, %v778
        %v784 = vmul.f32 %v712, %v783
        %v785 = vpack.c.bf16 %v739, %v739
        %v786 = vpack.c.bf16 %v754, %v754
        %v787 = vpack.c.bf16 %v769, %v769
        %v788 = vpack.c.bf16 %v784, %v784
        %789 = vrot.lane.b32.xlu0 %v594, 64
        %v790 = vpop.permute.xlu0 %789
        %v792 = vsel %vm597, %v785, 0
        %vm794 = vcmask 1043456
        %v796 = vsel %vm794, %v790, 0
        %798 = vmatpush.bf16.msra.mxu0 0
        %799 = vmatpush.bf16.msra.mxu0 0
        %800 = vmatpush.bf16.msra.mxu0 0
        %801 = vmatpush.bf16.msra.mxu0 0
        %802 = vmatpush.bf16.msra.mxu0 0
        %803 = vmatpush.bf16.msra.mxu0 0
        %804 = vmatpush.bf16.msra.mxu0 0
        %805 = vmatpush.bf16.msra.mxu0 %v796
        %806 = vmatmul.bf16.gmra.mxu0 %v792
        %v807 = vpop.f32.mrf.mxu0
        %v808 = vadd.f32 0.0, %v807
        %v809 = vpop.f32.mrf.mxu0
        %810 = vdwg.mxu0
        %811 = vrot.lane.b32.xlu0 %v619, 64
        %v812 = vpop.permute.xlu0 %811
        %v814 = vsel %vm597, %v786, 0
        %v817 = vsel %vm794, %v812, 0
        %819 = vmatpush.bf16.msra.mxu0 0
        %820 = vmatpush.bf16.msra.mxu0 0
        %821 = vmatpush.bf16.msra.mxu0 0
        %822 = vmatpush.bf16.msra.mxu0 0
        %823 = vmatpush.bf16.msra.mxu0 0
        %824 = vmatpush.bf16.msra.mxu0 0
        %825 = vmatpush.bf16.msra.mxu0 0
        %826 = vmatpush.bf16.msra.mxu0 %v817
        %827 = vmatmul.bf16.gmra.mxu0 %v814
        %v828 = vpop.f32.mrf.mxu0
        %v829 = vadd.f32 0.0, %v828
        %v830 = vpop.f32.mrf.mxu0
        %831 = vdwg.mxu0
        %832 = vrot.lane.b32.xlu0 %v643, 64
        %v833 = vpop.permute.xlu0 %832
        %v835 = vsel %vm597, %v787, 0
        %v838 = vsel %vm794, %v833, 0
        %840 = vmatpush.bf16.msra.mxu0 0
        %841 = vmatpush.bf16.msra.mxu0 0
        %842 = vmatpush.bf16.msra.mxu0 0
        %843 = vmatpush.bf16.msra.mxu0 0
        %844 = vmatpush.bf16.msra.mxu0 0
        %845 = vmatpush.bf16.msra.mxu0 0
        %846 = vmatpush.bf16.msra.mxu0 0
        %847 = vmatpush.bf16.msra.mxu0 %v838
        %848 = vmatmul.bf16.gmra.mxu0 %v835
        %v849 = vpop.f32.mrf.mxu0
        %v850 = vadd.f32 0.0, %v849
        %v851 = vpop.f32.mrf.mxu0
        %852 = vdwg.mxu0
        %853 = vrot.lane.b32.xlu0 %v667, 64
        %v854 = vpop.permute.xlu0 %853
        %v856 = vsel %vm597, %v788, 0
        %v859 = vsel %vm794, %v854, 0
        %861 = vmatpush.bf16.msra.mxu0 0
        %862 = vmatpush.bf16.msra.mxu0 0
        %863 = vmatpush.bf16.msra.mxu0 0
        %864 = vmatpush.bf16.msra.mxu0 0
        %865 = vmatpush.bf16.msra.mxu0 0
        %866 = vmatpush.bf16.msra.mxu0 0
        %867 = vmatpush.bf16.msra.mxu0 0
        %868 = vmatpush.bf16.msra.mxu0 %v859
        %869 = vmatmul.bf16.gmra.mxu0 %v856
        %v870 = vpop.f32.mrf.mxu0
        %v871 = vadd.f32 0.0, %v870
        %v872 = vpop.f32.mrf.mxu0
        %873 = vdwg.mxu0
        %875 = vrot.lane.b32.xlu0 %v829, 8
        %v876 = vpop.permute.xlu0 %875
        %879 = vrot.lane.b32.xlu0 %v850, 16
        %v880 = vpop.permute.xlu0 %879
        %883 = vrot.lane.b32.xlu0 %v871, 24
        %v884 = vpop.permute.xlu0 %883
        %v886 = vsel %vm597, %v808, %v876
        %vm887 = vcmask 130048
        %v888 = vsel %vm887, %v886, %v880
        %vm889 = vcmask 195584
        %v890 = vsel %vm889, %v888, %v884
        %v891 = vpack.c.bf16 %v890, %v890
        %v892 = vperm.slane %v540, 0
        %v897 = vunpack.c.l.b16 %v523
        %v898 = vunpack.c.l.b16 %v524
        %v899 = vunpack.c.l.b16 %v525
        %v900 = vunpack.c.l.b16 %v526
        %v901 = vpack.c.b16 %v898, %v897
        %v902 = vpack.c.b16 %v900, %v899
        %v906 = vsel %vm558, %v891, 0
        %908 = vmatpush.bf16.msra.mxu0 0
        %909 = vmatpush.bf16.msra.mxu0 0
        %910 = vmatpush.bf16.msra.mxu0 0
        %911 = vmatpush.bf16.msra.mxu0 0
        %912 = vmatpush.bf16.msra.mxu0 0
        %913 = vmatpush.bf16.msra.mxu0 0
        %914 = vmatpush.bf16.msra.mxu0 %v902
        %915 = vmatpush.bf16.msra.mxu0 %v901
        %916 = vmatmul.bf16.gmra.mxu0 %v906
        %v917 = vpop.f32.mrf.mxu0
        %v918 = vadd.f32 %v892, %v917
        %v919 = vpop.f32.mrf.mxu0
        %920 = vdwg.mxu0
        %v921 = vadd.f32 %v517, %v918
        %v922 = vsel %vm558, %v921, 0.0
        %923 = vadd.xlane.f32.xlu0 %v922
        %v924 = vpop.xlane.xlu0 %923
        %v925 = vrcp.pop 32.0
        %v926 = vmul.f32 32.0, %v925
        %v927 = vsub.f32 1.0, %v926
        %v928 = vmul.f32 %v925, %v927
        %v929 = vadd.f32 %v925, %v928
        %vm930 = vweird.f32 %v925
        %v931 = vsel %vm930, %v925, %v929
        %v932 = vmul.f32 %v924, %v931
        %v933 = vsub.f32 %v921, %v932
        %v934 = vmul.f32 %v933, %v933
        %v935 = vsel %vm558, %v934, 0.0
        %936 = vadd.xlane.f32.xlu0 %v935
        %v937 = vpop.xlane.xlu0 %936
        %v938 = vmul.f32 %v937, %v931
        %v939 = vadd.f32 %v938, 1e-05
        %v940 = vrsqrt.pop %v939
        %v941 = vmul.f32 %v940, %v939
        %v942 = vmul.f32 %v941, %v940
        %v943 = vmul.f32 0.5, %v942
        %v944 = vsub.f32 1.5, %v943
        %v945 = vmul.f32 %v940, %v944
        %vm946 = vweird.f32 %v939
        %vm947 = vweird.f32 %v940
        %vm948 = vmor %vm946, %vm947
        %v949 = vsel %vm948, %v940, %v945
        %v950 = vmul.f32 %v933, %v949
        %v951 = vperm.slane %v540, 1
        %v952 = vmul.f32 %v950, %v951
        %v953 = vperm.slane %v540, 2
        %v954 = vadd.f32 %v952, %v953
        %v955 = vpack.c.bf16 %v954, %v954
        %v957 = vperm.slane %v541, 0
        %v963 = vunpack.c.l.b16 %v527
        %v964 = vunpack.c.l.b16 %v528
        %v965 = vunpack.c.l.b16 %v529
        %v966 = vunpack.c.l.b16 %v530
        %v967 = vpack.c.b16 %v964, %v963
        %v968 = vpack.c.b16 %v966, %v965
        %v972 = vsel %vm558, %v955, 0
        %974 = vmatpush.bf16.msra.mxu0 0
        %975 = vmatpush.bf16.msra.mxu0 0
        %976 = vmatpush.bf16.msra.mxu0 0
        %977 = vmatpush.bf16.msra.mxu0 0
        %978 = vmatpush.bf16.msra.mxu0 0
        %979 = vmatpush.bf16.msra.mxu0 0
        %980 = vmatpush.bf16.msra.mxu0 %v968
        %981 = vmatpush.bf16.msra.mxu0 %v967
        %982 = vmatmul.bf16.gmra.mxu0 %v972
        %v983 = vpop.f32.mrf.mxu0
        %v984 = vadd.f32 %v957, %v983
        %v985 = vpop.f32.mrf.mxu0
        %986 = vdwg.mxu0
        %v987 = vmax.f32 %v984, 0.0
        %v988 = vpack.c.bf16 %v987, %v987
        %v989 = vperm.slane %v540, 3
        %v998 = vunpack.c.l.b16 %v531
        %v999 = vunpack.c.l.b16 %v532
        %v1000 = vunpack.c.l.b16 %v533
        %v1001 = vunpack.c.l.b16 %v534
        %v1002 = vunpack.c.l.b16 %v535
        %v1003 = vunpack.c.l.b16 %v536
        %v1004 = vunpack.c.l.b16 %v537
        %v1005 = vunpack.c.l.b16 %v538
        %v1006 = vpack.c.b16 %v999, %v998
        %v1007 = vpack.c.b16 %v1001, %v1000
        %v1008 = vpack.c.b16 %v1003, %v1002
        %v1009 = vpack.c.b16 %v1005, %v1004
        %vm1014 = vcmask 523264
        %v1016 = vsel %vm1014, %v988, 0
        %1018 = vmatpush.bf16.msra.mxu0 0
        %1019 = vmatpush.bf16.msra.mxu0 0
        %1020 = vmatpush.bf16.msra.mxu0 0
        %1021 = vmatpush.bf16.msra.mxu0 0
        %1022 = vmatpush.bf16.msra.mxu0 %v1009
        %1023 = vmatpush.bf16.msra.mxu0 %v1008
        %1024 = vmatpush.bf16.msra.mxu0 %v1007
        %1025 = vmatpush.bf16.msra.mxu0 %v1006
        %1026 = vmatmul.bf16.gmra.mxu0 %v1016
        %v1027 = vpop.f32.mrf.mxu0
        %v1028 = vadd.f32 %v989, %v1027
        %v1029 = vpop.f32.mrf.mxu0
        %1030 = vdwg.mxu0
        %v1031 = vadd.f32 %v954, %v1028
        %v1032 = vsel %vm558, %v1031, 0.0
        %1033 = vadd.xlane.f32.xlu0 %v1032
        %v1034 = vpop.xlane.xlu0 %1033
        %v1035 = vmul.f32 %v1034, %v931
        %v1036 = vsub.f32 %v1031, %v1035
        %v1037 = vmul.f32 %v1036, %v1036
        %v1038 = vsel %vm558, %v1037, 0.0
        %1039 = vadd.xlane.f32.xlu0 %v1038
        %v1040 = vpop.xlane.xlu0 %1039
        %v1041 = vmul.f32 %v1040, %v931
        %v1042 = vadd.f32 %v1041, 1e-05
        %v1043 = vrsqrt.pop %v1042
        %v1044 = vmul.f32 %v1043, %v1042
        %v1045 = vmul.f32 %v1044, %v1043
        %v1046 = vmul.f32 0.5, %v1045
        %v1047 = vsub.f32 1.5, %v1046
        %v1048 = vmul.f32 %v1043, %v1047
        %vm1049 = vweird.f32 %v1042
        %vm1050 = vweird.f32 %v1043
        %vm1051 = vmor %vm1049, %vm1050
        %v1052 = vsel %vm1051, %v1043, %v1048
        %v1053 = vmul.f32 %v1036, %v1052
        %v1054 = vperm.slane %v540, 4
        %v1055 = vmul.f32 %v1053, %v1054
        %v1056 = vperm.slane %v540, 5
        %v1057 = vadd.f32 %v1055, %v1056
        %1058 = vst.msk [vmem:[#allocation2] sm:$0xff] %vm558, %v1057
        %p1059 = scmp.eq.s32.totalorder %s29, 1
        // Predicated region
        $region65: #{encoder_forward.1} parent=59 // pred_check
          %p1060 = pneg %p1059
        $region66: #{encoder_forward.1} parent=59 // pred_check_branch
          %1062 = sbr.rel (%p1060) target = $region68
        $region67: #{encoder_forward.1} parent=59 // pred_region
          %1063 = vst.msk [vmem:[%s468] sm:$0xff] %vm558, %v1057
        $region68: #{encoder_forward.1} parent=59 // pred_fallthru
          _
        %s1064 = sand.u32 %s299, 1
        %s1065 = scalar_lea.sflag [#allocation4], %s1064
        %s1066 = sand.u32 %s299, 1
        %s1067 = smul.addr %s1066, 8
        %s1068 = scalar_lea.vmem [#allocation3], %s1067
        // Predicated region
        $region69: #{encoder_forward.1} parent=59 // pred_check
          %p1069 = pneg %p309
        $region70: #{encoder_forward.1} parent=59 // pred_check_branch
          %1071 = sbr.rel (%p1069) target = $region72
        $region71: #{encoder_forward.1} parent=59 // pred_region
          %1073 = vsyncadd %s1065, 0
          %s1074 = smul.addr %s28, 8
          %s1075 = scalar_lea.hbm %s10, %s1074
          %s1077 = sshll.u32 %s1068, 4
          %s1078 = int_to_ptr.vmem [resolvable:$true] %s1077
          %s1079 = sshll.u32 %s1075, 4
          %s1080 = int_to_ptr.hbm [resolvable:$true] %s1079
          %1082 = dma.vmem_to_hbm [thread:$0]  %s1078, 128, %s1080, %s1065
        $region72: #{encoder_forward.1} parent=59 // pred_fallthru
          _
      $region60: #{encoder_forward.1} parent=5 // pred_fallthru
        _
      %p1083 = scmp.le.s32.totalorder 2, %s19
      // Predicated region
      $region73: #{encoder_forward.1} parent=5 // pred_check
        %p1084 = pneg %p1083
      $region74: #{encoder_forward.1} parent=5 // pred_check_branch
        %1086 = sbr.rel (%p1084) target = $region76
      $region75: #{encoder_forward.1} parent=5 // pred_region
        %s1087 = ssub.s32 %s19, 2
        // Predicated region
        $region77: #{encoder_forward.1} parent=75 // pred_check
          %p1088 = pneg %p315
        $region78: #{encoder_forward.1} parent=75 // pred_check_branch
          %1090 = sbr.rel (%p1088) target = $region80
        $region79: #{encoder_forward.1} parent=75 // pred_region
          %s1091 = sand.u32 %s300, 1
          %s1092 = scalar_lea.sflag [#allocation4], %s1091
          %s1093 = sand.u32 %s300, 1
          %s1094 = smul.addr %s1093, 8
          %s1095 = scalar_lea.vmem [#allocation3], %s1094
          %1097 = dma.done %s1092, 128
        $region80: #{encoder_forward.1} parent=75 // pred_fallthru
          _
      $region76: #{encoder_forward.1} parent=5 // pred_fallthru
        _
    $region6: #{encoder_forward.1} parent=1 // loop_footer
      %s23 = sadd.s32 1, %s19
    $region7: #{encoder_forward.1} parent=1 // loop_footer_branch
      %18 = sbr.rel target = $region3
    $region8: #{encoder_forward.1} parent=1 // loop_exit
      _
    %1098 = vsyncpa [#allocation4], 1
    %s1099 = scalar_lea.sflag [#allocation4], 1
    %1100 = vsyncpa %s1099, 1

</llo_original>
